<compile_context>
chip_gen: v7x
topology: tpu7x:2x2x1
jax: 0.10.0
libtpu: 0.0.40
codegen_flags: <defaults>
</compile_context>

<pallas_src>
import jax
import jax.numpy as jnp
from jax.experimental import pallas as pl
from jax.experimental.pallas import tpu as pltpu


def _round_up(x, m):
    return (x + m - 1) // m * m


def _kernel_activation(y, act):
    """Activation applied inside the kernel (f32 in / f32 out)."""
    if act is None:
        return y
    if act == "sigmoid":
        # 1 / (1 + exp(-y)): exp + approximate reciprocal both use the EUP slot,
        # keeping the divide off the VALU (meaningful on v5e at large M, free elsewhere).
        return pl.reciprocal(1.0 + jnp.exp(-y), approx=True)
    if act == "tanh":
        return jnp.tanh(y)
    if act == "relu":
        return jnp.maximum(y, 0.0)
    raise ValueError(f"unknown activation {act!r}")


def _reference_activation(y, act):
    if act is None:
        return y
    if act == "sigmoid":
        return jax.nn.sigmoid(y)
    if act == "tanh":
        return jnp.tanh(y)
    if act == "relu":
        return jnp.maximum(y, 0.0)
    raise ValueError(f"unknown activation {act!r}")


def _make_fused_mlp_kernel(activations):
    """Kernel args: x_ref (TM, raw_dim) bf16, then w0, b0, w1, b1, ..., o_ref."""
    n_layers = len(activations)

    def kernel(x_ref, *refs):
        o_ref = refs[-1]
        h = x_ref[...]                      # already bf16 (cast in the wrapper)
        for i, act in enumerate(activations):
            w = refs[2 * i][...]            # (K_i, N_i) bf16, VMEM-resident across grid
            b = refs[2 * i + 1][...]        # (1,  N_i) f32
            y = jnp.dot(h, w, preferred_element_type=jnp.float32) + b
            y = _kernel_activation(y, act)
            if i + 1 < n_layers:
                h = y.astype(jnp.bfloat16)
            else:
                o_ref[...] = y.astype(o_ref.dtype)

    return kernel


def fused_autoencoder_forward(x, layers, *, block_m=256):
    """Whole autoencoder forward in one pallas_call, tiled over the batch.

    x:      (M, raw_dim) float32  (cast to bf16 before entering the kernel)
    layers: list of (w, b, act); w: (K, N) bf16 (already (in, out)); b: (1, N) f32.
    """
    M, raw_dim = x.shape
    activations = tuple(act for _, _, act in layers)
    out_dim = layers[-1][0].shape[1]

    # Batch tile: large enough to fill the 256-wide MXU; pad so every block is full.
    tm = min(block_m, _round_up(M, 16))
    m_pad = _round_up(M, tm)
    x_bf16 = x.astype(jnp.bfloat16)
    if m_pad != M:
        x_bf16 = jnp.pad(x_bf16, ((0, m_pad - M), (0, 0)))
    grid = (m_pad // tm,)

    flat_params = []
    in_specs = [pl.BlockSpec((tm, raw_dim), lambda i: (i, 0))]
    for w, b, _ in layers:
        flat_params.extend((w, b))
        # Constant index_map -> weight/bias DMA'd once, stays VMEM-resident all steps.
        in_specs.append(pl.BlockSpec(w.shape, lambda i: (0, 0)))
        in_specs.append(pl.BlockSpec(b.shape, lambda i: (0, 0)))
    out_spec = pl.BlockSpec((tm, out_dim), lambda i: (i, 0))

    # Advisory cost estimate so XLA schedules sensibly around the small custom call.
    flops = sum(2 * m_pad * w.shape[0] * w.shape[1] for w, _, _ in layers)
    transcendentals = sum(
        m_pad * w.shape[1] for w, _, act in layers if act in ("sigmoid", "tanh")
    )
    bytes_accessed = (
        x_bf16.size * x_bf16.dtype.itemsize
        + sum(w.size * w.dtype.itemsize + b.size * b.dtype.itemsize
              for w, b, _ in layers)
        + m_pad * out_dim * 4
    )

    kernel = _make_fused_mlp_kernel(activations)
    out = pl.pallas_call(
        kernel,
        out_shape=jax.ShapeDtypeStruct((m_pad, out_dim), jnp.float32),
        grid_spec=pltpu.PrefetchScalarGridSpec(
            num_scalar_prefetch=0,
            grid=grid,
            in_specs=in_specs,
            out_specs=out_spec,
        ),
        compiler_params=pltpu.CompilerParams(
            # Batch tiles are independent -> shard the grid across v7x's 2 TCs.
            dimension_semantics=("parallel",),
        ),
        cost_estimate=pl.CostEstimate(
            flops=flops,
            transcendentals=transcendentals,
            bytes_accessed=bytes_accessed,
        ),
    )(x_bf16, *flat_params)
    return out[:M]


class SimpleAutoencoderPallas:
    """JAX/Pallas port of SimpleAutoencoder (dropout=False, batchnorm=False)."""

    def __init__(
        self,
        raw_dim,
        in_mlp_hidden_dims=(128,),
        compressed_dim=256,
        out_mlp_hidden_dims=(128,),
        activation="sigmoid",
        seed=0,
    ):
        self.activation = activation
        key = jax.random.PRNGKey(seed)

        def make_layers(dims, key):
            layers = []
            for i, (h0, h1) in enumerate(zip(dims[:-1], dims[1:])):
                key, kw, kb = jax.random.split(key, 3)
                bound = 1.0 / (h0 ** 0.5)  # matches nn.Linear default init range
                # Weight stored already transposed: (in, out), bf16 for HBM/MXU.
                w = jax.random.uniform(
                    kw, (h0, h1), jnp.float32, minval=-bound, maxval=bound
                ).astype(jnp.bfloat16)
                b = jax.random.uniform(
                    kb, (1, h1), jnp.float32, minval=-bound, maxval=bound
                )
                act = activation if i < len(dims) - 2 else None
                layers.append((w, b, act))
            return layers, key

        in_dims = [raw_dim] + list(in_mlp_hidden_dims) + [compressed_dim]
        out_dims = [compressed_dim] + list(out_mlp_hidden_dims) + [raw_dim]
        self.in_mlp, key = make_layers(in_dims, key)
        self.out_mlp, key = make_layers(out_dims, key)
        self.layers = self.in_mlp + self.out_mlp
        # TODO(synk): dropout / batchnorm branches of the PyTorch module (default off)
        # are not implemented; forward semantics below match dropout=False, batchnorm=False.

    def __call__(self, x):
        # NOTE: for serving loops, batch many requests into one call — the per-call
        # launch + weight-DMA fixed cost dominates at this problem size.
        return fused_autoencoder_forward(x, self.layers)


def _reference_forward(model, x):
    """Pure-JAX reference mirroring the kernel's bf16-weight / f32-accum chain."""
    n = len(model.layers)
    h = x.astype(jnp.bfloat16)
    for i, (w, b, act) in enumerate(model.layers):
        y = jnp.dot(h, w, preferred_element_type=jnp.float32) + b
        y = _reference_activation(y, act)
        h = y.astype(jnp.bfloat16) if i + 1 < n else y
    return h


if __name__ == "__main__":
    # 512 rows -> 2 grid steps of TM=256: fills the 256-wide MXU and lets the
    # "parallel" batch grid engage both TensorCores on v7x. Still <1 MiB of data.
    batch = 512
    raw_dim = 256
    model = SimpleAutoencoderPallas(
        raw_dim=raw_dim,
        in_mlp_hidden_dims=(128,),
        compressed_dim=256,
        out_mlp_hidden_dims=(128,),
        activation="sigmoid",
        seed=0,
    )

    key = jax.random.PRNGKey(0)
    x = jax.random.normal(key, (batch, raw_dim), dtype=jnp.float32)

    out = jax.block_until_ready(model(x))

    ref = _reference_forward(model, x)
    assert out.shape == (batch, raw_dim)
    max_err = float(jnp.max(jnp.abs(out - ref)))
    assert jnp.allclose(out, ref, atol=2e-2, rtol=2e-2), max_err

    print("KERNEL_OK")
</pallas_src>

<mosaic_0001>
module attributes {stable_mosaic.version = 11 : i64} {
  func.func @kernel(%arg0: i32, %arg1: memref<256x256xbf16, #tpu.memory_space<vmem>>, %arg2: memref<256x128xbf16, #tpu.memory_space<vmem>>, %arg3: memref<1x128xf32, #tpu.memory_space<vmem>>, %arg4: memref<128x256xbf16, #tpu.memory_space<vmem>>, %arg5: memref<1x256xf32, #tpu.memory_space<vmem>>, %arg6: memref<256x128xbf16, #tpu.memory_space<vmem>>, %arg7: memref<1x128xf32, #tpu.memory_space<vmem>>, %arg8: memref<128x256xbf16, #tpu.memory_space<vmem>>, %arg9: memref<1x256xf32, #tpu.memory_space<vmem>>, %arg10: memref<256x256xf32, #tpu.memory_space<vmem>>) attributes {dimension_semantics = [#tpu.dimension_semantics<parallel>], iteration_bounds = array<i64: 2>, scalar_prefetch = 0 : i64, scratch_operands = 0 : i64, tpu.core_type = #tpu.core_type<tc>, window_params = [{transform_indices = @transform_0, window_bounds = array<i64: 256, 256>}, {pipeline_mode = #tpu.pipeline_mode<synchronous>, transform_indices = @transform_1, window_bounds = array<i64: 256, 128>}, {pipeline_mode = #tpu.pipeline_mode<synchronous>, transform_indices = @transform_2, window_bounds = array<i64: 1, 128>}, {pipeline_mode = #tpu.pipeline_mode<synchronous>, transform_indices = @transform_3, window_bounds = array<i64: 128, 256>}, {pipeline_mode = #tpu.pipeline_mode<synchronous>, transform_indices = @transform_4, window_bounds = array<i64: 1, 256>}, {pipeline_mode = #tpu.pipeline_mode<synchronous>, transform_indices = @transform_5, window_bounds = array<i64: 256, 128>}, {pipeline_mode = #tpu.pipeline_mode<synchronous>, transform_indices = @transform_6, window_bounds = array<i64: 1, 128>}, {pipeline_mode = #tpu.pipeline_mode<synchronous>, transform_indices = @transform_7, window_bounds = array<i64: 128, 256>}, {pipeline_mode = #tpu.pipeline_mode<synchronous>, transform_indices = @transform_8, window_bounds = array<i64: 1, 256>}, {transform_indices = @transform_9, window_bounds = array<i64: 256, 256>}]} {
    %c0 = arith.constant 0 : index
    %c0_0 = arith.constant 0 : index
    %0 = vector.load %arg1[%c0, %c0_0] : memref<256x256xbf16, #tpu.memory_space<vmem>>, vector<256x256xbf16>
    %c0_1 = arith.constant 0 : index
    %c0_2 = arith.constant 0 : index
    %1 = vector.load %arg2[%c0_1, %c0_2] : memref<256x128xbf16, #tpu.memory_space<vmem>>, vector<256x128xbf16>
    %c0_3 = arith.constant 0 : index
    %c0_4 = arith.constant 0 : index
    %2 = vector.load %arg3[%c0_3, %c0_4] : memref<1x128xf32, #tpu.memory_space<vmem>>, vector<1x128xf32>
    %cst = arith.constant dense<0.000000e+00> : vector<256x128xf32>
    %3 = tpu.matmul %0, %1, %cst {dimension_numbers = #tpu.dot_dimension_numbers<[1], [0], [0], [1], [0, 0, 1, 1], [], []>} : vector<256x256xbf16>, vector<256x128xbf16>, vector<256x128xf32> -> vector<256x128xf32>
    %4 = vector.broadcast %2 : vector<1x128xf32> to vector<256x128xf32>
    %5 = arith.addf %3, %4 : vector<256x128xf32>
    %cst_5 = arith.constant 0.000000e+00 : f32
    %6 = vector.broadcast %cst_5 : f32 to vector<256x128xf32>
    %7 = arith.subf %6, %5 : vector<256x128xf32>
    %8 = math.exp %7 : vector<256x128xf32>
    %cst_6 = arith.constant 1.000000e+00 : f32
    %9 = vector.broadcast %cst_6 : f32 to vector<256x128xf32>
    %10 = arith.addf %9, %8 : vector<256x128xf32>
    %11 = tpu.reciprocal %10 {approx = true} : vector<256x128xf32> -> vector<256x128xf32>
    %12 = arith.truncf %11 : vector<256x128xf32> to vector<256x128xbf16>
    %c0_7 = arith.constant 0 : index
    %c0_8 = arith.constant 0 : index
    %13 = vector.load %arg4[%c0_7, %c0_8] : memref<128x256xbf16, #tpu.memory_space<vmem>>, vector<128x256xbf16>
    %c0_9 = arith.constant 0 : index
    %c0_10 = arith.constant 0 : index
    %14 = vector.load %arg5[%c0_9, %c0_10] : memref<1x256xf32, #tpu.memory_space<vmem>>, vector<1x256xf32>
    %cst_11 = arith.constant dense<0.000000e+00> : vector<256x256xf32>
    %15 = tpu.matmul %12, %13, %cst_11 {dimension_numbers = #tpu.dot_dimension_numbers<[1], [0], [0], [1], [0, 0, 1, 1], [], []>} : vector<256x128xbf16>, vector<128x256xbf16>, vector<256x256xf32> -> vector<256x256xf32>
    %16 = vector.broadcast %14 : vector<1x256xf32> to vector<256x256xf32>
    %17 = arith.addf %15, %16 : vector<256x256xf32>
    %18 = arith.truncf %17 : vector<256x256xf32> to vector<256x256xbf16>
    %c0_12 = arith.constant 0 : index
    %c0_13 = arith.constant 0 : index
    %19 = vector.load %arg6[%c0_12, %c0_13] : memref<256x128xbf16, #tpu.memory_space<vmem>>, vector<256x128xbf16>
    %c0_14 = arith.constant 0 : index
    %c0_15 = arith.constant 0 : index
    %20 = vector.load %arg7[%c0_14, %c0_15] : memref<1x128xf32, #tpu.memory_space<vmem>>, vector<1x128xf32>
    %cst_16 = arith.constant dense<0.000000e+00> : vector<256x128xf32>
    %21 = tpu.matmul %18, %19, %cst_16 {dimension_numbers = #tpu.dot_dimension_numbers<[1], [0], [0], [1], [0, 0, 1, 1], [], []>} : vector<256x256xbf16>, vector<256x128xbf16>, vector<256x128xf32> -> vector<256x128xf32>
    %22 = vector.broadcast %20 : vector<1x128xf32> to vector<256x128xf32>
    %23 = arith.addf %21, %22 : vector<256x128xf32>
    %cst_17 = arith.constant 0.000000e+00 : f32
    %24 = vector.broadcast %cst_17 : f32 to vector<256x128xf32>
    %25 = arith.subf %24, %23 : vector<256x128xf32>
    %26 = math.exp %25 : vector<256x128xf32>
    %cst_18 = arith.constant 1.000000e+00 : f32
    %27 = vector.broadcast %cst_18 : f32 to vector<256x128xf32>
    %28 = arith.addf %27, %26 : vector<256x128xf32>
    %29 = tpu.reciprocal %28 {approx = true} : vector<256x128xf32> -> vector<256x128xf32>
    %30 = arith.truncf %29 : vector<256x128xf32> to vector<256x128xbf16>
    %c0_19 = arith.constant 0 : index
    %c0_20 = arith.constant 0 : index
    %31 = vector.load %arg8[%c0_19, %c0_20] : memref<128x256xbf16, #tpu.memory_space<vmem>>, vector<128x256xbf16>
    %c0_21 = arith.constant 0 : index
    %c0_22 = arith.constant 0 : index
    %32 = vector.load %arg9[%c0_21, %c0_22] : memref<1x256xf32, #tpu.memory_space<vmem>>, vector<1x256xf32>
    %cst_23 = arith.constant dense<0.000000e+00> : vector<256x256xf32>
    %33 = tpu.matmul %30, %31, %cst_23 {dimension_numbers = #tpu.dot_dimension_numbers<[1], [0], [0], [1], [0, 0, 1, 1], [], []>} : vector<256x128xbf16>, vector<128x256xbf16>, vector<256x256xf32> -> vector<256x256xf32>
    %34 = vector.broadcast %32 : vector<1x256xf32> to vector<256x256xf32>
    %35 = arith.addf %33, %34 : vector<256x256xf32>
    %c0_24 = arith.constant 0 : index
    %c0_25 = arith.constant 0 : index
    %36 = vector.load %arg10[%c0_24, %c0_25] : memref<256x256xf32, #tpu.memory_space<vmem>>, vector<256x256xf32>
    tpu.vector_store %arg10[%c0_24, %c0_25], %35 {strides = array<i32>} : memref<256x256xf32, #tpu.memory_space<vmem>>, vector<256x256xf32>,
    return
  }
  func.func @transform_0(%arg0: i32) -> (i32, i32) {
    %c0_i32 = arith.constant 0 : i32
    %c0_i32_0 = arith.constant 0 : i32
    return %arg0, %c0_i32 : i32, i32
  }
  func.func @transform_1(%arg0: i32) -> (i32, i32) {
    %c0_i32 = arith.constant 0 : i32
    %c0_i32_0 = arith.constant 0 : i32
    %c0_i32_1 = arith.constant 0 : i32
    return %c0_i32, %c0_i32_0 : i32, i32
  }
  func.func @transform_2(%arg0: i32) -> (i32, i32) {
    %c0_i32 = arith.constant 0 : i32
    %c0_i32_0 = arith.constant 0 : i32
    %c0_i32_1 = arith.constant 0 : i32
    return %c0_i32, %c0_i32_0 : i32, i32
  }
  func.func @transform_3(%arg0: i32) -> (i32, i32) {
    %c0_i32 = arith.constant 0 : i32
    %c0_i32_0 = arith.constant 0 : i32
    %c0_i32_1 = arith.constant 0 : i32
    return %c0_i32, %c0_i32_0 : i32, i32
  }
  func.func @transform_4(%arg0: i32) -> (i32, i32) {
    %c0_i32 = arith.constant 0 : i32
    %c0_i32_0 = arith.constant 0 : i32
    %c0_i32_1 = arith.constant 0 : i32
    return %c0_i32, %c0_i32_0 : i32, i32
  }
  func.func @transform_5(%arg0: i32) -> (i32, i32) {
    %c0_i32 = arith.constant 0 : i32
    %c0_i32_0 = arith.constant 0 : i32
    %c0_i32_1 = arith.constant 0 : i32
    return %c0_i32, %c0_i32_0 : i32, i32
  }
  func.func @transform_6(%arg0: i32) -> (i32, i32) {
    %c0_i32 = arith.constant 0 : i32
    %c0_i32_0 = arith.constant 0 : i32
    %c0_i32_1 = arith.constant 0 : i32
    return %c0_i32, %c0_i32_0 : i32, i32
  }
  func.func @transform_7(%arg0: i32) -> (i32, i32) {
    %c0_i32 = arith.constant 0 : i32
    %c0_i32_0 = arith.constant 0 : i32
    %c0_i32_1 = arith.constant 0 : i32
    return %c0_i32, %c0_i32_0 : i32, i32
  }
  func.func @transform_8(%arg0: i32) -> (i32, i32) {
    %c0_i32 = arith.constant 0 : i32
    %c0_i32_0 = arith.constant 0 : i32
    %c0_i32_1 = arith.constant 0 : i32
    return %c0_i32, %c0_i32_0 : i32, i32
  }
  func.func @transform_9(%arg0: i32) -> (i32, i32) {
    %c0_i32 = arith.constant 0 : i32
    %c0_i32_0 = arith.constant 0 : i32
    return %arg0, %c0_i32 : i32, i32
  }
}

</mosaic_0001>

<llo_original>
// kernel: tpu_custom_call.1
$region0: #{tpu_custom_call.1}
  #allocation0 [shape = 'u32[]', space=smem, size = 0x4, offset = 0x4, fixed_abs, tag = 'smem constant byte address 0x4 - core index']
  #allocation1 [shape = 'u32[144,128]{1,0:T(1,128)}', space=vmem, size = 0x12000, scoped, tag = 'internal scratch']
  %s0 = inlined_call_operand.hbm [shape: bf16[512,256], index: 0, kind: input, shape index: {}]
  %s1 = inlined_call_operand.hbm [shape: bf16[256,128], index: 1, kind: input, shape index: {}]
  %s2 = inlined_call_operand.vmem [shape: f32[1,128], index: 2, kind: input, shape index: {}]
  %s3 = inlined_call_operand.hbm [shape: bf16[128,256], index: 3, kind: input, shape index: {}]
  %s4 = inlined_call_operand.vmem [shape: f32[1,256], index: 4, kind: input, shape index: {}]
  %s5 = inlined_call_operand.hbm [shape: bf16[256,128], index: 5, kind: input, shape index: {}]
  %s6 = inlined_call_operand.vmem [shape: f32[1,128], index: 6, kind: input, shape index: {}]
  %s7 = inlined_call_operand.hbm [shape: bf16[128,256], index: 7, kind: input, shape index: {}]
  %s8 = inlined_call_operand.vmem [shape: f32[1,256], index: 8, kind: input, shape index: {}]
  %s9 = inlined_call_operand.hbm [shape: f32[512,256], index: 9, kind: output, shape index: {}]
  %s10 = sld [smem:[#allocation0]]
  $region89: #{tpu_custom_call.1} parent=0
    _
  %s12 = ssub.s32 1, %s10
  %s13 = scalar_select 0, %s12, %s10
  $region1: #{tpu_custom_call.1} parent=0
    #allocation2 [shape = 'u8[262144]{0}', space=vmem, size = 0x40000, scoped, tag = 'input window, operand 0']
    #allocation3 [shape = 's32[2]{0}', space=sflag, size = 0x8, scoped, tag = 'scoped memory for tpu_custom_call.1']
    #allocation4 [shape = 's32[2]{0}', space=sflag, size = 0x8, scoped, tag = 'scoped memory for tpu_custom_call.1']
    #allocation5 [shape = 'u8[65536]{0}', space=vmem, size = 0x10000, scoped, tag = 'input window, operand 1, single buffered']
    #allocation6 [shape = 's32[1]{0}', space=sflag, size = 0x4, scoped, tag = 'scoped memory for tpu_custom_call.1']
    #allocation7 [shape = 'u8[65536]{0}', space=vmem, size = 0x10000, scoped, tag = 'input window, operand 3, single buffered']
    #allocation8 [shape = 'u8[65536]{0}', space=vmem, size = 0x10000, scoped, tag = 'input window, operand 5, single buffered']
    #allocation9 [shape = 's32[1]{0}', space=sflag, size = 0x4, scoped, tag = 'scoped memory for tpu_custom_call.1']
    #allocation10 [shape = 'u8[65536]{0}', space=vmem, size = 0x10000, scoped, tag = 'input window, operand 7, single buffered']
    #allocation11 [shape = 'u8[524288]{0}', space=vmem, size = 0x80000, scoped, tag = 'output window, operand 0']
    %14 = vsyncpa [#allocation3], 0
    %s15 = scalar_lea.sflag [#allocation3], 1
    %16 = vsyncpa %s15, 0
    %17 = vsyncpa [#allocation6], 0
    %18 = vsyncpa [#allocation9], 0
    %19 = vsyncpa [#allocation4], 0
    %s20 = scalar_lea.sflag [#allocation4], 1
    %21 = vsyncpa %s20, 0
    loop: start=0, step=1, limit=4
    $region2: #{tpu_custom_call.1} parent=1 // loop_pre_header
      _
    $region3: #{tpu_custom_call.1} parent=1 // loop_header
      %s23 = sphi 0, %s27
      %p24 = scmp.ge.s32.totalorder %s23, 4
      %s33 = sphi 0, %s35
      %s36 = sphi 0, %s33
      %s37 = sphi 0, %s36
      %s53 = sphi 0, %s37
      %s57 = sphi 0, %s57
      %s59 = sphi 0, %s57
      %s60 = sphi 0, %s59
      %s74 = sphi 0, %s60
      %s78 = sphi 0, %s78
      %s80 = sphi 0, %s78
      %s81 = sphi 0, %s80
      %s95 = sphi 0, %s81
      %s99 = sphi 0, %s99
      %s101 = sphi 0, %s99
      %s102 = sphi 0, %s101
      %s116 = sphi 0, %s102
      %s120 = sphi 0, %s120
      %s122 = sphi 0, %s120
      %s123 = sphi 0, %s122
      %s137 = sphi 0, %s123
      %s141 = sphi 0, %s141
      %s143 = sphi 0, %s141
      %s144 = sphi 0, %s143
      %s158 = sphi 0, %s144
      %s162 = sphi 0, %s162
      %s164 = sphi 0, %s162
      %s165 = sphi 0, %s164
      %s179 = sphi 0, %s165
      %s183 = sphi 0, %s183
      %s185 = sphi 0, %s183
      %s186 = sphi 0, %s185
      %s200 = sphi 0, %s186
      %s204 = sphi 0, %s204
      %s206 = sphi 0, %s204
      %s207 = sphi 0, %s206
      %s221 = sphi 0, %s207
      %s227 = sphi 0, %s229
      %s230 = sphi 0, %s227
      %s231 = sphi 0, %s230
      %s247 = sphi 0, %s231
    $region4: #{tpu_custom_call.1} parent=1 // loop_header_branch
      %26 = sbr.rel (%p24) target = $region8
    $region5: #{tpu_custom_call.1} parent=1 // loop_body
      %s28 = ssub.s32 %s23, 1
      %s29 = ssub.s32 %s23, 2
      %s30 = sadd.s32 %s23, 1
      %s31 = ssub.s32 %s23, %s30
      %p32 = scmp.eq.s32.totalorder %s31, 0
      %s34 = sadd.s32 %s33, 1
      %s35 = scalar_select %p32, %s33, %s34
      %p38 = pneg %p32
      %p39 = scmp.eq.s32.totalorder %s23, 1
      %p40 = por %p38, %p39
      %p41 = scmp.ne.s32.totalorder %s33, %s36
      %p42 = scmp.eq.s32.totalorder %s23, 0
      %p43 = por %p41, %p42
      %p44 = scmp.ne.s32.totalorder %s33, %s36
      %p45 = scmp.eq.s32.totalorder %s28, 1
      %p46 = por %p44, %p45
      %p47 = scmp.ne.s32.totalorder %s36, %s37
      %p48 = scmp.eq.s32.totalorder %s28, 0
      %p49 = por %p47, %p48
      %p50 = scmp.ne.s32.totalorder %s36, %s37
      %p51 = scmp.eq.s32.totalorder %s29, 1
      %p52 = por %p50, %p51
      %p54 = scmp.ne.s32.totalorder %s37, %s53
      %p55 = scmp.eq.s32.totalorder %s29, 0
      %p56 = por %p54, %p55
      %s58 = sadd.s32 %s57, 1
      %p61 = scmp.eq.s32.totalorder %s23, 1
      %p62 = scmp.ne.s32.totalorder %s57, %s59
      %p63 = scmp.eq.s32.totalorder %s23, 0
      %p64 = por %p62, %p63
      %p65 = scmp.ne.s32.totalorder %s57, %s59
      %p66 = scmp.eq.s32.totalorder %s28, 1
      %p67 = por %p65, %p66
      %p68 = scmp.ne.s32.totalorder %s59, %s60
      %p69 = scmp.eq.s32.totalorder %s28, 0
      %p70 = por %p68, %p69
      %p71 = scmp.ne.s32.totalorder %s59, %s60
      %p72 = scmp.eq.s32.totalorder %s29, 1
      %p73 = por %p71, %p72
      %p75 = scmp.ne.s32.totalorder %s60, %s74
      %p76 = scmp.eq.s32.totalorder %s29, 0
      %p77 = por %p75, %p76
      %s79 = sadd.s32 %s78, 1
      %p82 = scmp.eq.s32.totalorder %s23, 1
      %p83 = scmp.ne.s32.totalorder %s78, %s80
      %p84 = scmp.eq.s32.totalorder %s23, 0
      %p85 = por %p83, %p84
      %p86 = scmp.ne.s32.totalorder %s78, %s80
      %p87 = scmp.eq.s32.totalorder %s28, 1
      %p88 = por %p86, %p87
      %p89 = scmp.ne.s32.totalorder %s80, %s81
      %p90 = scmp.eq.s32.totalorder %s28, 0
      %p91 = por %p89, %p90
      %p92 = scmp.ne.s32.totalorder %s80, %s81
      %p93 = scmp.eq.s32.totalorder %s29, 1
      %p94 = por %p92, %p93
      %p96 = scmp.ne.s32.totalorder %s81, %s95
      %p97 = scmp.eq.s32.totalorder %s29, 0
      %p98 = por %p96, %p97
      %s100 = sadd.s32 %s99, 1
      %p103 = scmp.eq.s32.totalorder %s23, 1
      %p104 = scmp.ne.s32.totalorder %s99, %s101
      %p105 = scmp.eq.s32.totalorder %s23, 0
      %p106 = por %p104, %p105
      %p107 = scmp.ne.s32.totalorder %s99, %s101
      %p108 = scmp.eq.s32.totalorder %s28, 1
      %p109 = por %p107, %p108
      %p110 = scmp.ne.s32.totalorder %s101, %s102
      %p111 = scmp.eq.s32.totalorder %s28, 0
      %p112 = por %p110, %p111
      %p113 = scmp.ne.s32.totalorder %s101, %s102
      %p114 = scmp.eq.s32.totalorder %s29, 1
      %p115 = por %p113, %p114
      %p117 = scmp.ne.s32.totalorder %s102, %s116
      %p118 = scmp.eq.s32.totalorder %s29, 0
      %p119 = por %p117, %p118
      %s121 = sadd.s32 %s120, 1
      %p124 = scmp.eq.s32.totalorder %s23, 1
      %p125 = scmp.ne.s32.totalorder %s120, %s122
      %p126 = scmp.eq.s32.totalorder %s23, 0
      %p127 = por %p125, %p126
      %p128 = scmp.ne.s32.totalorder %s120, %s122
      %p129 = scmp.eq.s32.totalorder %s28, 1
      %p130 = por %p128, %p129
      %p131 = scmp.ne.s32.totalorder %s122, %s123
      %p132 = scmp.eq.s32.totalorder %s28, 0
      %p133 = por %p131, %p132
      %p134 = scmp.ne.s32.totalorder %s122, %s123
      %p135 = scmp.eq.s32.totalorder %s29, 1
      %p136 = por %p134, %p135
      %p138 = scmp.ne.s32.totalorder %s123, %s137
      %p139 = scmp.eq.s32.totalorder %s29, 0
      %p140 = por %p138, %p139
      %s142 = sadd.s32 %s141, 1
      %p145 = scmp.eq.s32.totalorder %s23, 1
      %p146 = scmp.ne.s32.totalorder %s141, %s143
      %p147 = scmp.eq.s32.totalorder %s23, 0
      %p148 = por %p146, %p147
      %p149 = scmp.ne.s32.totalorder %s141, %s143
      %p150 = scmp.eq.s32.totalorder %s28, 1
      %p151 = por %p149, %p150
      %p152 = scmp.ne.s32.totalorder %s143, %s144
      %p153 = scmp.eq.s32.totalorder %s28, 0
      %p154 = por %p152, %p153
      %p155 = scmp.ne.s32.totalorder %s143, %s144
      %p156 = scmp.eq.s32.totalorder %s29, 1
      %p157 = por %p155, %p156
      %p159 = scmp.ne.s32.totalorder %s144, %s158
      %p160 = scmp.eq.s32.totalorder %s29, 0
      %p161 = por %p159, %p160
      %s163 = sadd.s32 %s162, 1
      %p166 = scmp.eq.s32.totalorder %s23, 1
      %p167 = scmp.ne.s32.totalorder %s162, %s164
      %p168 = scmp.eq.s32.totalorder %s23, 0
      %p169 = por %p167, %p168
      %p170 = scmp.ne.s32.totalorder %s162, %s164
      %p171 = scmp.eq.s32.totalorder %s28, 1
      %p172 = por %p170, %p171
      %p173 = scmp.ne.s32.totalorder %s164, %s165
      %p174 = scmp.eq.s32.totalorder %s28, 0
      %p175 = por %p173, %p174
      %p176 = scmp.ne.s32.totalorder %s164, %s165
      %p177 = scmp.eq.s32.totalorder %s29, 1
      %p178 = por %p176, %p177
      %p180 = scmp.ne.s32.totalorder %s165, %s179
      %p181 = scmp.eq.s32.totalorder %s29, 0
      %p182 = por %p180, %p181
      %s184 = sadd.s32 %s183, 1
      %p187 = scmp.eq.s32.totalorder %s23, 1
      %p188 = scmp.ne.s32.totalorder %s183, %s185
      %p189 = scmp.eq.s32.totalorder %s23, 0
      %p190 = por %p188, %p189
      %p191 = scmp.ne.s32.totalorder %s183, %s185
      %p192 = scmp.eq.s32.totalorder %s28, 1
      %p193 = por %p191, %p192
      %p194 = scmp.ne.s32.totalorder %s185, %s186
      %p195 = scmp.eq.s32.totalorder %s28, 0
      %p196 = por %p194, %p195
      %p197 = scmp.ne.s32.totalorder %s185, %s186
      %p198 = scmp.eq.s32.totalorder %s29, 1
      %p199 = por %p197, %p198
      %p201 = scmp.ne.s32.totalorder %s186, %s200
      %p202 = scmp.eq.s32.totalorder %s29, 0
      %p203 = por %p201, %p202
      %s205 = sadd.s32 %s204, 1
      %p208 = scmp.eq.s32.totalorder %s23, 1
      %p209 = scmp.ne.s32.totalorder %s204, %s206
      %p210 = scmp.eq.s32.totalorder %s23, 0
      %p211 = por %p209, %p210
      %p212 = scmp.ne.s32.totalorder %s204, %s206
      %p213 = scmp.eq.s32.totalorder %s28, 1
      %p214 = por %p212, %p213
      %p215 = scmp.ne.s32.totalorder %s206, %s207
      %p216 = scmp.eq.s32.totalorder %s28, 0
      %p217 = por %p215, %p216
      %p218 = scmp.ne.s32.totalorder %s206, %s207
      %p219 = scmp.eq.s32.totalorder %s29, 1
      %p220 = por %p218, %p219
      %p222 = scmp.ne.s32.totalorder %s207, %s221
      %p223 = scmp.eq.s32.totalorder %s29, 0
      %p224 = por %p222, %p223
      %s225 = ssub.s32 %s23, %s30
      %p226 = scmp.eq.s32.totalorder %s225, 0
      %s228 = sadd.s32 %s227, 1
      %s229 = scalar_select %p226, %s227, %s228
      %p232 = pneg %p226
      %p233 = scmp.eq.s32.totalorder %s23, 1
      %p234 = por %p232, %p233
      %p235 = scmp.ne.s32.totalorder %s227, %s230
      %p236 = scmp.eq.s32.totalorder %s23, 0
      %p237 = por %p235, %p236
      %p238 = scmp.ne.s32.totalorder %s227, %s230
      %p239 = scmp.eq.s32.totalorder %s28, 1
      %p240 = por %p238, %p239
      %p241 = scmp.ne.s32.totalorder %s230, %s231
      %p242 = scmp.eq.s32.totalorder %s28, 0
      %p243 = por %p241, %p242
      %p244 = scmp.ne.s32.totalorder %s230, %s231
      %p245 = scmp.eq.s32.totalorder %s29, 1
      %p246 = por %p244, %p245
      %p248 = scmp.ne.s32.totalorder %s231, %s247
      %p249 = scmp.eq.s32.totalorder %s29, 0
      %p250 = por %p248, %p249
      %p251 = scmp.le.s32.totalorder 1, %s23
      %p252 = scmp.lt.s32.totalorder %s23, 3
      %p253 = pnand %p251, %p252
      %p254 = pneg %p253
      // Predicated region
      $region9: #{tpu_custom_call.1} parent=5 // pred_check
        _
      $region10: #{tpu_custom_call.1} parent=5 // pred_check_branch
        %256 = sbr.rel (%p253) target = $region12
      $region11: #{tpu_custom_call.1} parent=5 // pred_region
        %s257 = ssub.s32 %s23, 1
        // Predicated region
        $region13: #{tpu_custom_call.1} parent=11 // pred_check
          %p258 = pneg %p70
        $region14: #{tpu_custom_call.1} parent=11 // pred_check_branch
          %260 = sbr.rel (%p258) target = $region16
        $region15: #{tpu_custom_call.1} parent=11 // pred_region
          %s262 = ssub.s32 2048, 2048
          %263 = vsyncadd [#allocation6], %s262
          %s264 = sshll.u32 [#allocation5], 4
          %s265 = int_to_ptr.vmem [resolvable:$true] %s264
          %270 = dma.hbm_to_vmem [thread:$0]  %s1, 2048, %s265, [#allocation6], 64, 64, 4
        $region16: #{tpu_custom_call.1} parent=11 // pred_fallthru
          _
        // Predicated region
        $region17: #{tpu_custom_call.1} parent=11 // pred_check
          %p271 = pneg %p91
        $region18: #{tpu_custom_call.1} parent=11 // pred_check_branch
          %273 = sbr.rel (%p271) target = $region20
        $region19: #{tpu_custom_call.1} parent=11 // pred_region
          _
        $region20: #{tpu_custom_call.1} parent=11 // pred_fallthru
          _
        // Predicated region
        $region21: #{tpu_custom_call.1} parent=11 // pred_check
          %p274 = pneg %p112
        $region22: #{tpu_custom_call.1} parent=11 // pred_check_branch
          %276 = sbr.rel (%p274) target = $region24
        $region23: #{tpu_custom_call.1} parent=11 // pred_region
          %s278 = ssub.s32 2048, 2048
          %279 = vsyncadd [#allocation6], %s278
          %s280 = sshll.u32 [#allocation7], 4
          %s281 = int_to_ptr.vmem [resolvable:$true] %s280
          %286 = dma.hbm_to_vmem [thread:$0]  %s3, 2048, %s281, [#allocation6], 128, 128, 8
        $region24: #{tpu_custom_call.1} parent=11 // pred_fallthru
          _
        // Predicated region
        $region25: #{tpu_custom_call.1} parent=11 // pred_check
          %p287 = pneg %p133
        $region26: #{tpu_custom_call.1} parent=11 // pred_check_branch
          %289 = sbr.rel (%p287) target = $region28
        $region27: #{tpu_custom_call.1} parent=11 // pred_region
          _
        $region28: #{tpu_custom_call.1} parent=11 // pred_fallthru
          _
        // Predicated region
        $region29: #{tpu_custom_call.1} parent=11 // pred_check
          %p290 = pneg %p154
        $region30: #{tpu_custom_call.1} parent=11 // pred_check_branch
          %292 = sbr.rel (%p290) target = $region32
        $region31: #{tpu_custom_call.1} parent=11 // pred_region
          %s294 = ssub.s32 2048, 2048
          %295 = vsyncadd [#allocation9], %s294
          %s296 = sshll.u32 [#allocation8], 4
          %s297 = int_to_ptr.vmem [resolvable:$true] %s296
          %302 = dma.hbm_to_vmem [thread:$0]  %s5, 2048, %s297, [#allocation9], 64, 64, 4
        $region32: #{tpu_custom_call.1} parent=11 // pred_fallthru
          _
        // Predicated region
        $region33: #{tpu_custom_call.1} parent=11 // pred_check
          %p303 = pneg %p175
        $region34: #{tpu_custom_call.1} parent=11 // pred_check_branch
          %305 = sbr.rel (%p303) target = $region36
        $region35: #{tpu_custom_call.1} parent=11 // pred_region
          _
        $region36: #{tpu_custom_call.1} parent=11 // pred_fallthru
          _
        // Predicated region
        $region37: #{tpu_custom_call.1} parent=11 // pred_check
          %p306 = pneg %p196
        $region38: #{tpu_custom_call.1} parent=11 // pred_check_branch
          %308 = sbr.rel (%p306) target = $region40
        $region39: #{tpu_custom_call.1} parent=11 // pred_region
          %s310 = ssub.s32 2048, 2048
          %311 = vsyncadd [#allocation9], %s310
          %s312 = sshll.u32 [#allocation10], 4
          %s313 = int_to_ptr.vmem [resolvable:$true] %s312
          %318 = dma.hbm_to_vmem [thread:$0]  %s7, 2048, %s313, [#allocation9], 128, 128, 8
        $region40: #{tpu_custom_call.1} parent=11 // pred_fallthru
          _
        // Predicated region
        $region41: #{tpu_custom_call.1} parent=11 // pred_check
          %p319 = pneg %p217
        $region42: #{tpu_custom_call.1} parent=11 // pred_check_branch
          %321 = sbr.rel (%p319) target = $region44
        $region43: #{tpu_custom_call.1} parent=11 // pred_region
          _
        $region44: #{tpu_custom_call.1} parent=11 // pred_fallthru
          _
      $region12: #{tpu_custom_call.1} parent=5 // pred_fallthru
        _
      %p322 = scmp.lt.s32.totalorder %s23, 2
      // Predicated region
      $region45: #{tpu_custom_call.1} parent=5 // pred_check
        %p323 = pneg %p322
      $region46: #{tpu_custom_call.1} parent=5 // pred_check_branch
        %325 = sbr.rel (%p323) target = $region48
      $region47: #{tpu_custom_call.1} parent=5 // pred_region
        // Predicated region
        $region49: #{tpu_custom_call.1} parent=47 // pred_check
          %p326 = pneg %p43
        $region50: #{tpu_custom_call.1} parent=47 // pred_check_branch
          %328 = sbr.rel (%p326) target = $region52
        $region51: #{tpu_custom_call.1} parent=47 // pred_region
          %s329 = sand.u32 %s33, 1
          %s330 = scalar_lea.sflag [#allocation3], %s329
          %s331 = sand.u32 %s33, 1
          %s332 = smul.addr %s331, 256
          %s333 = scalar_lea.vmem [#allocation2], %s332
          %s334 = smul.u32 32, %s23
          %s336 = ssub.s32 4096, 4096
          %337 = vsyncadd %s330, %s336
          %s338 = smul.addr %s334, 2
          %s339 = smul.addr %s338, 64
          %s340 = scalar_lea.hbm %s0, %s339
          %s341 = sshll.u32 %s333, 4
          %s342 = int_to_ptr.vmem [resolvable:$true] %s341
          %347 = dma.hbm_to_vmem [thread:$0]  %s340, 4096, %s342, %s330, 128, 128, 8
        $region52: #{tpu_custom_call.1} parent=47 // pred_fallthru
          _
      $region48: #{tpu_custom_call.1} parent=5 // pred_fallthru
        _
      %p348 = scmp.le.s32.totalorder 1, %s23
      %p349 = scmp.lt.s32.totalorder %s23, 3
      %p350 = pnand %p348, %p349
      %p351 = pneg %p350
      // Predicated region
      $region53: #{tpu_custom_call.1} parent=5 // pred_check
        _
      $region54: #{tpu_custom_call.1} parent=5 // pred_check_branch
        %353 = sbr.rel (%p350) target = $region56
      $region55: #{tpu_custom_call.1} parent=5 // pred_region
        %s354 = ssub.s32 %s23, 1
        %s355 = sand.u32 %s36, 1
        %s356 = scalar_lea.sflag [#allocation3], %s355
        %s357 = sand.u32 %s36, 1
        %s358 = smul.addr %s357, 256
        %s359 = scalar_lea.vmem [#allocation2], %s358
        // Predicated region
        $region57: #{tpu_custom_call.1} parent=55 // pred_check
          %p360 = pneg %p49
        $region58: #{tpu_custom_call.1} parent=55 // pred_check_branch
          %362 = sbr.rel (%p360) target = $region60
        $region59: #{tpu_custom_call.1} parent=55 // pred_region
          %363 = dma.done %s356, 4096
        $region60: #{tpu_custom_call.1} parent=55 // pred_fallthru
          _
        // Predicated region
        $region61: #{tpu_custom_call.1} parent=55 // pred_check
          %p364 = pneg %p70
        $region62: #{tpu_custom_call.1} parent=55 // pred_check_branch
          %366 = sbr.rel (%p364) target = $region64
        $region63: #{tpu_custom_call.1} parent=55 // pred_region
          %367 = dma.done [#allocation6], 2048
        $region64: #{tpu_custom_call.1} parent=55 // pred_fallthru
          _
        // Predicated region
        $region65: #{tpu_custom_call.1} parent=55 // pred_check
          %p368 = pneg %p112
        $region66: #{tpu_custom_call.1} parent=55 // pred_check_branch
          %370 = sbr.rel (%p368) target = $region68
        $region67: #{tpu_custom_call.1} parent=55 // pred_region
          %371 = dma.done [#allocation6], 2048
        $region68: #{tpu_custom_call.1} parent=55 // pred_fallthru
          _
        // Predicated region
        $region69: #{tpu_custom_call.1} parent=55 // pred_check
          %p372 = pneg %p154
        $region70: #{tpu_custom_call.1} parent=55 // pred_check_branch
          %374 = sbr.rel (%p372) target = $region72
        $region71: #{tpu_custom_call.1} parent=55 // pred_region
          %375 = dma.done [#allocation9], 2048
        $region72: #{tpu_custom_call.1} parent=55 // pred_fallthru
          _
        // Predicated region
        $region73: #{tpu_custom_call.1} parent=55 // pred_check
          %p376 = pneg %p196
        $region74: #{tpu_custom_call.1} parent=55 // pred_check_branch
          %378 = sbr.rel (%p376) target = $region76
        $region75: #{tpu_custom_call.1} parent=55 // pred_region
          %379 = dma.done [#allocation9], 2048
        $region76: #{tpu_custom_call.1} parent=55 // pred_fallthru
          _
        %s380 = sand.u32 %s36, 1
        %s381 = scalar_lea.sflag [#allocation3], %s380
        %s382 = sand.u32 %s36, 1
        %s383 = smul.addr %s382, 256
        %s384 = scalar_lea.vmem [#allocation2], %s383
        %p385 = pneg %p49
        %p386 = pneg %p46
        %p387 = pneg %p70
        %p388 = pneg %p67
        %p389 = pneg %p91
        %p390 = pneg %p88
        %p391 = pneg %p112
        %p392 = pneg %p109
        %p393 = pneg %p133
        %p394 = pneg %p130
        %p395 = pneg %p154
        %p396 = pneg %p151
        %p397 = pneg %p175
        %p398 = pneg %p172
        %p399 = pneg %p196
        %p400 = pneg %p193
        %p401 = pneg %p217
        %p402 = pneg %p214
        %p403 = pneg %p243
        %p404 = pneg %p240
        %s405 = sand.u32 %s230, 1
        %s406 = scalar_lea.sflag [#allocation4], %s405
        %s407 = sand.u32 %s230, 1
        %s408 = smul.addr %s407, 512
        %s409 = scalar_lea.vmem [#allocation11], %s408
        %s410 = smul.u32 32, %s28
        %s411 = smul.u32 32, %s28
        %v413 = vld [vmem:[%s359] sm:$0xff]
        %v414 = vld [vmem:[%s359 + $0x8] sm:$0xff]
        %v415 = vld [vmem:[%s359 + $0x10] sm:$0xff]
        %v416 = vld [vmem:[%s359 + $0x18] sm:$0xff]
        %v417 = vld [vmem:[%s359 + $0x20] sm:$0xff]
        %v418 = vld [vmem:[%s359 + $0x28] sm:$0xff]
        %v419 = vld [vmem:[%s359 + $0x30] sm:$0xff]
        %v420 = vld [vmem:[%s359 + $0x38] sm:$0xff]
        %v421 = vld [vmem:[%s359 + $0x40] sm:$0xff]
        %v422 = vld [vmem:[%s359 + $0x48] sm:$0xff]
        %v423 = vld [vmem:[%s359 + $0x50] sm:$0xff]
        %v424 = vld [vmem:[%s359 + $0x58] sm:$0xff]
        %v425 = vld [vmem:[%s359 + $0x60] sm:$0xff]
        %v426 = vld [vmem:[%s359 + $0x68] sm:$0xff]
        %v427 = vld [vmem:[%s359 + $0x70] sm:$0xff]
        %v428 = vld [vmem:[%s359 + $0x78] sm:$0xff]
        %v429 = vld [vmem:[%s359 + $0x80] sm:$0xff]
        %v430 = vld [vmem:[%s359 + $0x88] sm:$0xff]
        %v431 = vld [vmem:[%s359 + $0x90] sm:$0xff]
        %v432 = vld [vmem:[%s359 + $0x98] sm:$0xff]
        %v433 = vld [vmem:[%s359 + $0xa0] sm:$0xff]
        %v434 = vld [vmem:[%s359 + $0xa8] sm:$0xff]
        %v435 = vld [vmem:[%s359 + $0xb0] sm:$0xff]
        %v436 = vld [vmem:[%s359 + $0xb8] sm:$0xff]
        %v437 = vld [vmem:[%s359 + $0xc0] sm:$0xff]
        %v438 = vld [vmem:[%s359 + $0xc8] sm:$0xff]
        %v439 = vld [vmem:[%s359 + $0xd0] sm:$0xff]
        %v440 = vld [vmem:[%s359 + $0xd8] sm:$0xff]
        %v441 = vld [vmem:[%s359 + $0xe0] sm:$0xff]
        %v442 = vld [vmem:[%s359 + $0xe8] sm:$0xff]
        %v443 = vld [vmem:[%s359 + $0xf0] sm:$0xff]
        %v444 = vld [vmem:[%s359 + $0xf8] sm:$0xff]
        %v445 = vld [vmem:[#allocation5] sm:$0xf]
        %v446 = vld [vmem:[#allocation5 + $0x4] sm:$0xf]
        %v447 = vld [vmem:[#allocation5 + $0x8] sm:$0xf]
        %v448 = vld [vmem:[#allocation5 + $0xc] sm:$0xf]
        %v449 = vld [vmem:[#allocation5 + $0x10] sm:$0xf]
        %v450 = vld [vmem:[#allocation5 + $0x14] sm:$0xf]
        %v451 = vld [vmem:[#allocation5 + $0x18] sm:$0xf]
        %v452 = vld [vmem:[#allocation5 + $0x1c] sm:$0xf]
        %v453 = vld [vmem:[#allocation5 + $0x20] sm:$0xf]
        %v454 = vld [vmem:[#allocation5 + $0x24] sm:$0xf]
        %v455 = vld [vmem:[#allocation5 + $0x28] sm:$0xf]
        %v456 = vld [vmem:[#allocation5 + $0x2c] sm:$0xf]
        %v457 = vld [vmem:[#allocation5 + $0x30] sm:$0xf]
        %v458 = vld [vmem:[#allocation5 + $0x34] sm:$0xf]
        %v459 = vld [vmem:[#allocation5 + $0x38] sm:$0xf]
        %v460 = vld [vmem:[#allocation5 + $0x3c] sm:$0xf]
        %v461 = vld [vmem:[#allocation5 + $0x40] sm:$0xf]
        %v462 = vld [vmem:[#allocation5 + $0x44] sm:$0xf]
        %v463 = vld [vmem:[#allocation5 + $0x48] sm:$0xf]
        %v464 = vld [vmem:[#allocation5 + $0x4c] sm:$0xf]
        %v465 = vld [vmem:[#allocation5 + $0x50] sm:$0xf]
        %v466 = vld [vmem:[#allocation5 + $0x54] sm:$0xf]
        %v467 = vld [vmem:[#allocation5 + $0x58] sm:$0xf]
        %v468 = vld [vmem:[#allocation5 + $0x5c] sm:$0xf]
        %v469 = vld [vmem:[#allocation5 + $0x60] sm:$0xf]
        %v470 = vld [vmem:[#allocation5 + $0x64] sm:$0xf]
        %v471 = vld [vmem:[#allocation5 + $0x68] sm:$0xf]
        %v472 = vld [vmem:[#allocation5 + $0x6c] sm:$0xf]
        %v473 = vld [vmem:[#allocation5 + $0x70] sm:$0xf]
        %v474 = vld [vmem:[#allocation5 + $0x74] sm:$0xf]
        %v475 = vld [vmem:[#allocation5 + $0x78] sm:$0xf]
        %v476 = vld [vmem:[#allocation5 + $0x7c] sm:$0xf]
        %v477 = vld [vmem:[%s2] sm:$0x1]
        %v479 = vlaneseq
        %v480 = vshrl.u32 %v479, 7
        %v481 = vsub.s32 0, %v480
        %v482 = vrot.slane %v477, %v481
        %v516 = vunpack.c.l.b16 %v413
        %v517 = vunpack.c.h.b16 %v413
        %v518 = vunpack.c.l.b16 %v414
        %v519 = vunpack.c.h.b16 %v414
        %v520 = vunpack.c.l.b16 %v415
        %v521 = vunpack.c.h.b16 %v415
        %v522 = vunpack.c.l.b16 %v416
        %v523 = vunpack.c.h.b16 %v416
        %v524 = vunpack.c.l.b16 %v417
        %v525 = vunpack.c.h.b16 %v417
        %v526 = vunpack.c.l.b16 %v418
        %v527 = vunpack.c.h.b16 %v418
        %v528 = vunpack.c.l.b16 %v419
        %v529 = vunpack.c.h.b16 %v419
        %v530 = vunpack.c.l.b16 %v420
        %v531 = vunpack.c.h.b16 %v420
        %v532 = vunpack.c.l.b16 %v421
        %v533 = vunpack.c.h.b16 %v421
        %v534 = vunpack.c.l.b16 %v422
        %v535 = vunpack.c.h.b16 %v422
        %v536 = vunpack.c.l.b16 %v423
        %v537 = vunpack.c.h.b16 %v423
        %v538 = vunpack.c.l.b16 %v424
        %v539 = vunpack.c.h.b16 %v424
        %v540 = vunpack.c.l.b16 %v425
        %v541 = vunpack.c.h.b16 %v425
        %v542 = vunpack.c.l.b16 %v426
        %v543 = vunpack.c.h.b16 %v426
        %v544 = vunpack.c.l.b16 %v427
        %v545 = vunpack.c.h.b16 %v427
        %v546 = vunpack.c.l.b16 %v428
        %v547 = vunpack.c.h.b16 %v428
        %v548 = vunpack.c.l.b16 %v429
        %v549 = vunpack.c.h.b16 %v429
        %v550 = vunpack.c.l.b16 %v430
        %v551 = vunpack.c.h.b16 %v430
        %v552 = vunpack.c.l.b16 %v431
        %v553 = vunpack.c.h.b16 %v431
        %v554 = vunpack.c.l.b16 %v432
        %v555 = vunpack.c.h.b16 %v432
        %v556 = vunpack.c.l.b16 %v433
        %v557 = vunpack.c.h.b16 %v433
        %v558 = vunpack.c.l.b16 %v434
        %v559 = vunpack.c.h.b16 %v434
        %v560 = vunpack.c.l.b16 %v435
        %v561 = vunpack.c.h.b16 %v435
        %v562 = vunpack.c.l.b16 %v436
        %v563 = vunpack.c.h.b16 %v436
        %v564 = vunpack.c.l.b16 %v437
        %v565 = vunpack.c.h.b16 %v437
        %v566 = vunpack.c.l.b16 %v438
        %v567 = vunpack.c.h.b16 %v438
        %v568 = vunpack.c.l.b16 %v439
        %v569 = vunpack.c.h.b16 %v439
        %v570 = vunpack.c.l.b16 %v440
        %v571 = vunpack.c.h.b16 %v440
        %v572 = vunpack.c.l.b16 %v441
        %v573 = vunpack.c.h.b16 %v441
        %v574 = vunpack.c.l.b16 %v442
        %v575 = vunpack.c.h.b16 %v442
        %v576 = vunpack.c.l.b16 %v443
        %v577 = vunpack.c.h.b16 %v443
        %v578 = vunpack.c.l.b16 %v444
        %v579 = vunpack.c.h.b16 %v444
        %v580 = vpack.c.b16 %v518, %v516
        %v581 = vpack.c.b16 %v519, %v517
        %v582 = vpack.c.b16 %v522, %v520
        %v583 = vpack.c.b16 %v523, %v521
        %v584 = vpack.c.b16 %v526, %v524
        %v585 = vpack.c.b16 %v527, %v525
        %v586 = vpack.c.b16 %v530, %v528
        %v587 = vpack.c.b16 %v531, %v529
        %v588 = vpack.c.b16 %v534, %v532
        %v589 = vpack.c.b16 %v535, %v533
        %v590 = vpack.c.b16 %v538, %v536
        %v591 = vpack.c.b16 %v539, %v537
        %v592 = vpack.c.b16 %v542, %v540
        %v593 = vpack.c.b16 %v543, %v541
        %v594 = vpack.c.b16 %v546, %v544
        %v595 = vpack.c.b16 %v547, %v545
        %v596 = vpack.c.b16 %v550, %v548
        %v597 = vpack.c.b16 %v551, %v549
        %v598 = vpack.c.b16 %v554, %v552
        %v599 = vpack.c.b16 %v555, %v553
        %v600 = vpack.c.b16 %v558, %v556
        %v601 = vpack.c.b16 %v559, %v557
        %v602 = vpack.c.b16 %v562, %v560
        %v603 = vpack.c.b16 %v563, %v561
        %v604 = vpack.c.b16 %v566, %v564
        %v605 = vpack.c.b16 %v567, %v565
        %v606 = vpack.c.b16 %v570, %v568
        %v607 = vpack.c.b16 %v571, %v569
        %v608 = vpack.c.b16 %v574, %v572
        %v609 = vpack.c.b16 %v575, %v573
        %v610 = vpack.c.b16 %v578, %v576
        %v611 = vpack.c.b16 %v579, %v577
        %v676 = vunpack.c.l.b16 %v445
        %v677 = vunpack.c.l.b16 %v446
        %v678 = vunpack.c.l.b16 %v447
        %v679 = vunpack.c.l.b16 %v448
        %v680 = vunpack.c.l.b16 %v449
        %v681 = vunpack.c.l.b16 %v450
        %v682 = vunpack.c.l.b16 %v451
        %v683 = vunpack.c.l.b16 %v452
        %v684 = vunpack.c.l.b16 %v453
        %v685 = vunpack.c.l.b16 %v454
        %v686 = vunpack.c.l.b16 %v455
        %v687 = vunpack.c.l.b16 %v456
        %v688 = vunpack.c.l.b16 %v457
        %v689 = vunpack.c.l.b16 %v458
        %v690 = vunpack.c.l.b16 %v459
        %v691 = vunpack.c.l.b16 %v460
        %v692 = vunpack.c.l.b16 %v461
        %v693 = vunpack.c.l.b16 %v462
        %v694 = vunpack.c.l.b16 %v463
        %v695 = vunpack.c.l.b16 %v464
        %v696 = vunpack.c.l.b16 %v465
        %v697 = vunpack.c.l.b16 %v466
        %v698 = vunpack.c.l.b16 %v467
        %v699 = vunpack.c.l.b16 %v468
        %v700 = vunpack.c.l.b16 %v469
        %v701 = vunpack.c.l.b16 %v470
        %v702 = vunpack.c.l.b16 %v471
        %v703 = vunpack.c.l.b16 %v472
        %v704 = vunpack.c.l.b16 %v473
        %v705 = vunpack.c.l.b16 %v474
        %v706 = vunpack.c.l.b16 %v475
        %v707 = vunpack.c.l.b16 %v476
        %v708 = vpack.c.b16 %v677, %v676
        %v709 = vpack.c.b16 %v679, %v678
        %v710 = vpack.c.b16 %v681, %v680
        %v711 = vpack.c.b16 %v683, %v682
        %v712 = vpack.c.b16 %v685, %v684
        %v713 = vpack.c.b16 %v687, %v686
        %v714 = vpack.c.b16 %v689, %v688
        %v715 = vpack.c.b16 %v691, %v690
        %v716 = vpack.c.b16 %v693, %v692
        %v717 = vpack.c.b16 %v695, %v694
        %v718 = vpack.c.b16 %v697, %v696
        %v719 = vpack.c.b16 %v699, %v698
        %v720 = vpack.c.b16 %v701, %v700
        %v721 = vpack.c.b16 %v703, %v702
        %v722 = vpack.c.b16 %v705, %v704
        %v723 = vpack.c.b16 %v707, %v706
        %740 = vmatprep.subr.bf16.mxu0 0
        %741 = vmatpush1.bf16.msra.mxu0 %v708
        %742 = vmatprep.subr.bf16.mxu0 0
        %743 = vmatpush1.bf16.msra.mxu0 %v709
        %744 = vmatprep.subr.bf16.mxu0 0
        %745 = vmatpush1.bf16.msra.mxu0 %v710
        %746 = vmatprep.subr.bf16.mxu0 0
        %747 = vmatpush1.bf16.msra.mxu0 %v711
        %748 = vmatprep.subr.bf16.mxu0 0
        %749 = vmatpush1.bf16.msra.mxu0 %v712
        %750 = vmatprep.subr.bf16.mxu0 0
        %751 = vmatpush1.bf16.msra.mxu0 %v713
        %752 = vmatprep.subr.bf16.mxu0 0
        %753 = vmatpush1.bf16.msra.mxu0 %v714
        %754 = vmatprep.subr.bf16.mxu0 0
        %755 = vmatpush1.bf16.msra.mxu0 %v715
        %756 = vmatprep.subr.bf16.mxu0 0
        %757 = vmatpush1.bf16.msra.mxu0 %v716
        %758 = vmatprep.subr.bf16.mxu0 0
        %759 = vmatpush1.bf16.msra.mxu0 %v717
        %760 = vmatprep.subr.bf16.mxu0 0
        %761 = vmatpush1.bf16.msra.mxu0 %v718
        %762 = vmatprep.subr.bf16.mxu0 0
        %763 = vmatpush1.bf16.msra.mxu0 %v719
        %764 = vmatprep.subr.bf16.mxu0 0
        %765 = vmatpush1.bf16.msra.mxu0 %v720
        %766 = vmatprep.subr.bf16.mxu0 0
        %767 = vmatpush1.bf16.msra.mxu0 %v721
        %768 = vmatprep.subr.bf16.mxu0 0
        %769 = vmatpush1.bf16.msra.mxu0 %v722
        %770 = vmatprep.subr.bf16.mxu0 0
        %771 = vmatpush1.bf16.msra.mxu0 %v723
        %772 = vmatprep.mubr.bf16.mxu0 %v581
        %773 = vmatmul.mubr.bf16.gmra.mrb[0].mxu0 %v580
        %v774 = vpop.f32.mrb[0].mxu0
        %v775 = vadd.f32 %v482, %v774
        %v776 = vpop.f32.mrb[0].mxu0
        %v777 = vpop.f32.mrb[0].mxu0
        %v778 = vadd.f32 %v482, %v777
        %v779 = vpop.f32.mrb[0].mxu0
        %780 = vmatprep.mubr.bf16.mxu0 %v583
        %781 = vmatmul.mubr.bf16.gmra.mrb[0].mxu0 %v582
        %v782 = vpop.f32.mrb[0].mxu0
        %v783 = vadd.f32 %v482, %v782
        %v784 = vpop.f32.mrb[0].mxu0
        %v785 = vpop.f32.mrb[0].mxu0
        %v786 = vadd.f32 %v482, %v785
        %v787 = vpop.f32.mrb[0].mxu0
        %788 = vmatprep.mubr.bf16.mxu0 %v585
        %789 = vmatmul.mubr.bf16.gmra.mrb[0].mxu0 %v584
        %v790 = vpop.f32.mrb[0].mxu0
        %v791 = vadd.f32 %v482, %v790
        %v792 = vpop.f32.mrb[0].mxu0
        %v793 = vpop.f32.mrb[0].mxu0
        %v794 = vadd.f32 %v482, %v793
        %v795 = vpop.f32.mrb[0].mxu0
        %796 = vmatprep.mubr.bf16.mxu0 %v587
        %797 = vmatmul.mubr.bf16.gmra.mrb[0].mxu0 %v586
        %v798 = vpop.f32.mrb[0].mxu0
        %v799 = vadd.f32 %v482, %v798
        %v800 = vpop.f32.mrb[0].mxu0
        %v801 = vpop.f32.mrb[0].mxu0
        %v802 = vadd.f32 %v482, %v801
        %v803 = vpop.f32.mrb[0].mxu0
        %804 = vmatprep.mubr.bf16.mxu0 %v589
        %805 = vmatmul.mubr.bf16.gmra.mrb[0].mxu0 %v588
        %v806 = vpop.f32.mrb[0].mxu0
        %v807 = vadd.f32 %v482, %v806
        %v808 = vpop.f32.mrb[0].mxu0
        %v809 = vpop.f32.mrb[0].mxu0
        %v810 = vadd.f32 %v482, %v809
        %v811 = vpop.f32.mrb[0].mxu0
        %812 = vmatprep.mubr.bf16.mxu0 %v591
        %813 = vmatmul.mubr.bf16.gmra.mrb[0].mxu0 %v590
        %v814 = vpop.f32.mrb[0].mxu0
        %v815 = vadd.f32 %v482, %v814
        %v816 = vpop.f32.mrb[0].mxu0
        %v817 = vpop.f32.mrb[0].mxu0
        %v818 = vadd.f32 %v482, %v817
        %v819 = vpop.f32.mrb[0].mxu0
        %820 = vmatprep.mubr.bf16.mxu0 %v593
        %821 = vmatmul.mubr.bf16.gmra.mrb[0].mxu0 %v592
        %v822 = vpop.f32.mrb[0].mxu0
        %v823 = vadd.f32 %v482, %v822
        %v824 = vpop.f32.mrb[0].mxu0
        %v825 = vpop.f32.mrb[0].mxu0
        %v826 = vadd.f32 %v482, %v825
        %v827 = vpop.f32.mrb[0].mxu0
        %828 = vmatprep.mubr.bf16.mxu0 %v595
        %829 = vmatmul.mubr.bf16.gmra.mrb[0].mxu0 %v594
        %v830 = vpop.f32.mrb[0].mxu0
        %v831 = vadd.f32 %v482, %v830
        %v832 = vpop.f32.mrb[0].mxu0
        %v833 = vpop.f32.mrb[0].mxu0
        %v834 = vadd.f32 %v482, %v833
        %v835 = vpop.f32.mrb[0].mxu0
        %836 = vmatprep.mubr.bf16.mxu0 %v597
        %837 = vmatmul.mubr.bf16.gmra.mrb[0].mxu0 %v596
        %v838 = vpop.f32.mrb[0].mxu0
        %v839 = vadd.f32 %v482, %v838
        %v840 = vpop.f32.mrb[0].mxu0
        %v841 = vpop.f32.mrb[0].mxu0
        %v842 = vadd.f32 %v482, %v841
        %v843 = vpop.f32.mrb[0].mxu0
        %844 = vmatprep.mubr.bf16.mxu0 %v599
        %845 = vmatmul.mubr.bf16.gmra.mrb[0].mxu0 %v598
        %v846 = vpop.f32.mrb[0].mxu0
        %v847 = vadd.f32 %v482, %v846
        %v848 = vpop.f32.mrb[0].mxu0
        %v849 = vpop.f32.mrb[0].mxu0
        %v850 = vadd.f32 %v482, %v849
        %v851 = vpop.f32.mrb[0].mxu0
        %852 = vmatprep.mubr.bf16.mxu0 %v601
        %853 = vmatmul.mubr.bf16.gmra.mrb[0].mxu0 %v600
        %v854 = vpop.f32.mrb[0].mxu0
        %v855 = vadd.f32 %v482, %v854
        %v856 = vpop.f32.mrb[0].mxu0
        %v857 = vpop.f32.mrb[0].mxu0
        %v858 = vadd.f32 %v482, %v857
        %v859 = vpop.f32.mrb[0].mxu0
        %860 = vmatprep.mubr.bf16.mxu0 %v603
        %861 = vmatmul.mubr.bf16.gmra.mrb[0].mxu0 %v602
        %v862 = vpop.f32.mrb[0].mxu0
        %v863 = vadd.f32 %v482, %v862
        %v864 = vpop.f32.mrb[0].mxu0
        %v865 = vpop.f32.mrb[0].mxu0
        %v866 = vadd.f32 %v482, %v865
        %v867 = vpop.f32.mrb[0].mxu0
        %868 = vmatprep.mubr.bf16.mxu0 %v605
        %869 = vmatmul.mubr.bf16.gmra.mrb[0].mxu0 %v604
        %v870 = vpop.f32.mrb[0].mxu0
        %v871 = vadd.f32 %v482, %v870
        %v872 = vpop.f32.mrb[0].mxu0
        %v873 = vpop.f32.mrb[0].mxu0
        %v874 = vadd.f32 %v482, %v873
        %v875 = vpop.f32.mrb[0].mxu0
        %876 = vmatprep.mubr.bf16.mxu0 %v607
        %877 = vmatmul.mubr.bf16.gmra.mrb[0].mxu0 %v606
        %v878 = vpop.f32.mrb[0].mxu0
        %v879 = vadd.f32 %v482, %v878
        %v880 = vpop.f32.mrb[0].mxu0
        %v881 = vpop.f32.mrb[0].mxu0
        %v882 = vadd.f32 %v482, %v881
        %v883 = vpop.f32.mrb[0].mxu0
        %884 = vmatprep.mubr.bf16.mxu0 %v609
        %885 = vmatmul.mubr.bf16.gmra.mrb[0].mxu0 %v608
        %v886 = vpop.f32.mrb[0].mxu0
        %v887 = vadd.f32 %v482, %v886
        %v888 = vpop.f32.mrb[0].mxu0
        %v889 = vpop.f32.mrb[0].mxu0
        %v890 = vadd.f32 %v482, %v889
        %v891 = vpop.f32.mrb[0].mxu0
        %892 = vmatprep.mubr.bf16.mxu0 %v611
        %893 = vmatmul.mubr.bf16.gmra.mrb[0].mxu0 %v610
        %v894 = vpop.f32.mrb[0].mxu0
        %v895 = vadd.f32 %v482, %v894
        %v896 = vpop.f32.mrb[0].mxu0
        %v897 = vpop.f32.mrb[0].mxu0
        %v898 = vadd.f32 %v482, %v897
        %v899 = vpop.f32.mrb[0].mxu0
        %900 = vdwg.mxu0
        %v901 = vsub.f32 0.0, %v775
        %v902 = vsub.f32 0.0, %v778
        %v903 = vsub.f32 0.0, %v783
        %v904 = vsub.f32 0.0, %v786
        %v905 = vsub.f32 0.0, %v791
        %v906 = vsub.f32 0.0, %v794
        %v907 = vsub.f32 0.0, %v799
        %v908 = vsub.f32 0.0, %v802
        %v909 = vsub.f32 0.0, %v807
        %v910 = vsub.f32 0.0, %v810
        %v911 = vsub.f32 0.0, %v815
        %v912 = vsub.f32 0.0, %v818
        %v913 = vsub.f32 0.0, %v823
        %v914 = vsub.f32 0.0, %v826
        %v915 = vsub.f32 0.0, %v831
        %v916 = vsub.f32 0.0, %v834
        %v917 = vsub.f32 0.0, %v839
        %v918 = vsub.f32 0.0, %v842
        %v919 = vsub.f32 0.0, %v847
        %v920 = vsub.f32 0.0, %v850
        %v921 = vsub.f32 0.0, %v855
        %v922 = vsub.f32 0.0, %v858
        %v923 = vsub.f32 0.0, %v863
        %v924 = vsub.f32 0.0, %v866
        %v925 = vsub.f32 0.0, %v871
        %v926 = vsub.f32 0.0, %v874
        %v927 = vsub.f32 0.0, %v879
        %v928 = vsub.f32 0.0, %v882
        %v929 = vsub.f32 0.0, %v887
        %v930 = vsub.f32 0.0, %v890
        %v931 = vsub.f32 0.0, %v895
        %v932 = vsub.f32 0.0, %v898
        %v933 = vmul.f32 %v901, 1.442695
        %v934 = vpow.pop %v933
        %v935 = vmul.f32 %v902, 1.442695
        %v936 = vpow.pop %v935
        %v937 = vmul.f32 %v903, 1.442695
        %v938 = vpow.pop %v937
        %v939 = vmul.f32 %v904, 1.442695
        %v940 = vpow.pop %v939
        %v941 = vmul.f32 %v905, 1.442695
        %v942 = vpow.pop %v941
        %v943 = vmul.f32 %v906, 1.442695
        %v944 = vpow.pop %v943
        %v945 = vmul.f32 %v907, 1.442695
        %v946 = vpow.pop %v945
        %v947 = vmul.f32 %v908, 1.442695
        %v948 = vpow.pop %v947
        %v949 = vmul.f32 %v909, 1.442695
        %v950 = vpow.pop %v949
        %v951 = vmul.f32 %v910, 1.442695
        %v952 = vpow.pop %v951
        %v953 = vmul.f32 %v911, 1.442695
        %v954 = vpow.pop %v953
        %v955 = vmul.f32 %v912, 1.442695
        %v956 = vpow.pop %v955
        %v957 = vmul.f32 %v913, 1.442695
        %v958 = vpow.pop %v957
        %v959 = vmul.f32 %v914, 1.442695
        %v960 = vpow.pop %v959
        %v961 = vmul.f32 %v915, 1.442695
        %v962 = vpow.pop %v961
        %v963 = vmul.f32 %v916, 1.442695
        %v964 = vpow.pop %v963
        %v965 = vmul.f32 %v917, 1.442695
        %v966 = vpow.pop %v965
        %v967 = vmul.f32 %v918, 1.442695
        %v968 = vpow.pop %v967
        %v969 = vmul.f32 %v919, 1.442695
        %v970 = vpow.pop %v969
        %v971 = vmul.f32 %v920, 1.442695
        %v972 = vpow.pop %v971
        %v973 = vmul.f32 %v921, 1.442695
        %v974 = vpow.pop %v973
        %v975 = vmul.f32 %v922, 1.442695
        %v976 = vpow.pop %v975
        %v977 = vmul.f32 %v923, 1.442695
        %v978 = vpow.pop %v977
        %v979 = vmul.f32 %v924, 1.442695
        %v980 = vpow.pop %v979
        %v981 = vmul.f32 %v925, 1.442695
        %v982 = vpow.pop %v981
        %v983 = vmul.f32 %v926, 1.442695
        %v984 = vpow.pop %v983
        %v985 = vmul.f32 %v927, 1.442695
        %v986 = vpow.pop %v985
        %v987 = vmul.f32 %v928, 1.442695
        %v988 = vpow.pop %v987
        %v989 = vmul.f32 %v929, 1.442695
        %v990 = vpow.pop %v989
        %v991 = vmul.f32 %v930, 1.442695
        %v992 = vpow.pop %v991
        %v993 = vmul.f32 %v931, 1.442695
        %v994 = vpow.pop %v993
        %v995 = vmul.f32 %v932, 1.442695
        %v996 = vpow.pop %v995
        %v997 = vadd.f32 %v934, 1.0
        %v998 = vadd.f32 %v936, 1.0
        %v999 = vadd.f32 %v938, 1.0
        %v1000 = vadd.f32 %v940, 1.0
        %v1001 = vadd.f32 %v942, 1.0
        %v1002 = vadd.f32 %v944, 1.0
        %v1003 = vadd.f32 %v946, 1.0
        %v1004 = vadd.f32 %v948, 1.0
        %v1005 = vadd.f32 %v950, 1.0
        %v1006 = vadd.f32 %v952, 1.0
        %v1007 = vadd.f32 %v954, 1.0
        %v1008 = vadd.f32 %v956, 1.0
        %v1009 = vadd.f32 %v958, 1.0
        %v1010 = vadd.f32 %v960, 1.0
        %v1011 = vadd.f32 %v962, 1.0
        %v1012 = vadd.f32 %v964, 1.0
        %v1013 = vadd.f32 %v966, 1.0
        %v1014 = vadd.f32 %v968, 1.0
        %v1015 = vadd.f32 %v970, 1.0
        %v1016 = vadd.f32 %v972, 1.0
        %v1017 = vadd.f32 %v974, 1.0
        %v1018 = vadd.f32 %v976, 1.0
        %v1019 = vadd.f32 %v978, 1.0
        %v1020 = vadd.f32 %v980, 1.0
        %v1021 = vadd.f32 %v982, 1.0
        %v1022 = vadd.f32 %v984, 1.0
        %v1023 = vadd.f32 %v986, 1.0
        %v1024 = vadd.f32 %v988, 1.0
        %v1025 = vadd.f32 %v990, 1.0
        %v1026 = vadd.f32 %v992, 1.0
        %v1027 = vadd.f32 %v994, 1.0
        %v1028 = vadd.f32 %v996, 1.0
        %v1029 = vrcp.pop %v997
        %v1030 = vrcp.pop %v998
        %v1031 = vrcp.pop %v999
        %v1032 = vrcp.pop %v1000
        %v1033 = vrcp.pop %v1001
        %v1034 = vrcp.pop %v1002
        %v1035 = vrcp.pop %v1003
        %v1036 = vrcp.pop %v1004
        %v1037 = vrcp.pop %v1005
        %v1038 = vrcp.pop %v1006
        %v1039 = vrcp.pop %v1007
        %v1040 = vrcp.pop %v1008
        %v1041 = vrcp.pop %v1009
        %v1042 = vrcp.pop %v1010
        %v1043 = vrcp.pop %v1011
        %v1044 = vrcp.pop %v1012
        %v1045 = vrcp.pop %v1013
        %v1046 = vrcp.pop %v1014
        %v1047 = vrcp.pop %v1015
        %v1048 = vrcp.pop %v1016
        %v1049 = vrcp.pop %v1017
        %v1050 = vrcp.pop %v1018
        %v1051 = vrcp.pop %v1019
        %v1052 = vrcp.pop %v1020
        %v1053 = vrcp.pop %v1021
        %v1054 = vrcp.pop %v1022
        %v1055 = vrcp.pop %v1023
        %v1056 = vrcp.pop %v1024
        %v1057 = vrcp.pop %v1025
        %v1058 = vrcp.pop %v1026
        %v1059 = vrcp.pop %v1027
        %v1060 = vrcp.pop %v1028
        %v1061 = vpack.c.bf16 %v1030, %v1029
        %v1062 = vpack.c.bf16 %v1032, %v1031
        %v1063 = vpack.c.bf16 %v1034, %v1033
        %v1064 = vpack.c.bf16 %v1036, %v1035
        %v1065 = vpack.c.bf16 %v1038, %v1037
        %v1066 = vpack.c.bf16 %v1040, %v1039
        %v1067 = vpack.c.bf16 %v1042, %v1041
        %v1068 = vpack.c.bf16 %v1044, %v1043
        %v1069 = vpack.c.bf16 %v1046, %v1045
        %v1070 = vpack.c.bf16 %v1048, %v1047
        %v1071 = vpack.c.bf16 %v1050, %v1049
        %v1072 = vpack.c.bf16 %v1052, %v1051
        %v1073 = vpack.c.bf16 %v1054, %v1053
        %v1074 = vpack.c.bf16 %v1056, %v1055
        %v1075 = vpack.c.bf16 %v1058, %v1057
        %v1076 = vpack.c.bf16 %v1060, %v1059
        %v1077 = vld [vmem:[#allocation7] sm:$0xff]
        %v1078 = vld [vmem:[#allocation7 + $0x8] sm:$0xff]
        %v1079 = vld [vmem:[#allocation7 + $0x10] sm:$0xff]
        %v1080 = vld [vmem:[#allocation7 + $0x18] sm:$0xff]
        %v1081 = vld [vmem:[#allocation7 + $0x20] sm:$0xff]
        %v1082 = vld [vmem:[#allocation7 + $0x28] sm:$0xff]
        %v1083 = vld [vmem:[#allocation7 + $0x30] sm:$0xff]
        %v1084 = vld [vmem:[#allocation7 + $0x38] sm:$0xff]
        %v1085 = vld [vmem:[#allocation7 + $0x40] sm:$0xff]
        %v1086 = vld [vmem:[#allocation7 + $0x48] sm:$0xff]
        %v1087 = vld [vmem:[#allocation7 + $0x50] sm:$0xff]
        %v1088 = vld [vmem:[#allocation7 + $0x58] sm:$0xff]
        %v1089 = vld [vmem:[#allocation7 + $0x60] sm:$0xff]
        %v1090 = vld [vmem:[#allocation7 + $0x68] sm:$0xff]
        %v1091 = vld [vmem:[#allocation7 + $0x70] sm:$0xff]
        %v1092 = vld [vmem:[#allocation7 + $0x78] sm:$0xff]
        %v1093 = vld [vmem:[%s4] sm:$0x3]
        %v1095 = vlaneseq
        %v1096 = vshrl.u32 %v1095, 7
        %v1097 = vsub.s32 0, %v1096
        %v1098 = vrot.slane %v1093, %v1097
        %v1099 = vlaneseq
        %v1100 = vshrl.u32 %v1099, 7
        %v1101 = vsub.s32 1, %v1100
        %v1102 = vrot.slane %v1093, %v1101
        %v1121 = vunpack.c.l.b16 %v1077
        %v1122 = vunpack.c.h.b16 %v1077
        %v1123 = vunpack.c.l.b16 %v1078
        %v1124 = vunpack.c.h.b16 %v1078
        %v1125 = vunpack.c.l.b16 %v1079
        %v1126 = vunpack.c.h.b16 %v1079
        %v1127 = vunpack.c.l.b16 %v1080
        %v1128 = vunpack.c.h.b16 %v1080
        %v1129 = vunpack.c.l.b16 %v1081
        %v1130 = vunpack.c.h.b16 %v1081
        %v1131 = vunpack.c.l.b16 %v1082
        %v1132 = vunpack.c.h.b16 %v1082
        %v1133 = vunpack.c.l.b16 %v1083
        %v1134 = vunpack.c.h.b16 %v1083
        %v1135 = vunpack.c.l.b16 %v1084
        %v1136 = vunpack.c.h.b16 %v1084
        %v1137 = vunpack.c.l.b16 %v1085
        %v1138 = vunpack.c.h.b16 %v1085
        %v1139 = vunpack.c.l.b16 %v1086
        %v1140 = vunpack.c.h.b16 %v1086
        %v1141 = vunpack.c.l.b16 %v1087
        %v1142 = vunpack.c.h.b16 %v1087
        %v1143 = vunpack.c.l.b16 %v1088
        %v1144 = vunpack.c.h.b16 %v1088
        %v1145 = vunpack.c.l.b16 %v1089
        %v1146 = vunpack.c.h.b16 %v1089
        %v1147 = vunpack.c.l.b16 %v1090
        %v1148 = vunpack.c.h.b16 %v1090
        %v1149 = vunpack.c.l.b16 %v1091
        %v1150 = vunpack.c.h.b16 %v1091
        %v1151 = vunpack.c.l.b16 %v1092
        %v1152 = vunpack.c.h.b16 %v1092
        %v1153 = vpack.c.b16 %v1123, %v1121
        %v1154 = vpack.c.b16 %v1124, %v1122
        %v1155 = vpack.c.b16 %v1127, %v1125
        %v1156 = vpack.c.b16 %v1128, %v1126
        %v1157 = vpack.c.b16 %v1131, %v1129
        %v1158 = vpack.c.b16 %v1132, %v1130
        %v1159 = vpack.c.b16 %v1135, %v1133
        %v1160 = vpack.c.b16 %v1136, %v1134
        %v1161 = vpack.c.b16 %v1139, %v1137
        %v1162 = vpack.c.b16 %v1140, %v1138
        %v1163 = vpack.c.b16 %v1143, %v1141
        %v1164 = vpack.c.b16 %v1144, %v1142
        %v1165 = vpack.c.b16 %v1147, %v1145
        %v1166 = vpack.c.b16 %v1148, %v1146
        %v1167 = vpack.c.b16 %v1151, %v1149
        %v1168 = vpack.c.b16 %v1152, %v1150
        %1185 = vmatprep.subr.bf16.mxu0 %v1154
        %1186 = vmatpush1.bf16.msra.mxu0 %v1153
        %1187 = vmatprep.subr.bf16.mxu0 %v1156
        %1188 = vmatpush1.bf16.msra.mxu0 %v1155
        %1189 = vmatprep.subr.bf16.mxu0 %v1158
        %1190 = vmatpush1.bf16.msra.mxu0 %v1157
        %1191 = vmatprep.subr.bf16.mxu0 %v1160
        %1192 = vmatpush1.bf16.msra.mxu0 %v1159
        %1193 = vmatprep.subr.bf16.mxu0 %v1162
        %1194 = vmatpush1.bf16.msra.mxu0 %v1161
        %1195 = vmatprep.subr.bf16.mxu0 %v1164
        %1196 = vmatpush1.bf16.msra.mxu0 %v1163
        %1197 = vmatprep.subr.bf16.mxu0 %v1166
        %1198 = vmatpush1.bf16.msra.mxu0 %v1165
        %1199 = vmatprep.subr.bf16.mxu0 %v1168
        %1200 = vmatpush1.bf16.msra.mxu0 %v1167
        %1201 = vmatprep.subr.bf16.mxu0 0
        %1202 = vmatpush1.bf16.msra.mxu0 0
        %1203 = vmatprep.subr.bf16.mxu0 0
        %1204 = vmatpush1.bf16.msra.mxu0 0
        %1205 = vmatprep.subr.bf16.mxu0 0
        %1206 = vmatpush1.bf16.msra.mxu0 0
        %1207 = vmatprep.subr.bf16.mxu0 0
        %1208 = vmatpush1.bf16.msra.mxu0 0
        %1209 = vmatprep.subr.bf16.mxu0 0
        %1210 = vmatpush1.bf16.msra.mxu0 0
        %1211 = vmatprep.subr.bf16.mxu0 0
        %1212 = vmatpush1.bf16.msra.mxu0 0
        %1213 = vmatprep.subr.bf16.mxu0 0
        %1214 = vmatpush1.bf16.msra.mxu0 0
        %1215 = vmatprep.subr.bf16.mxu0 0
        %1216 = vmatpush1.bf16.msra.mxu0 0
        %1217 = vmatprep.mubr.bf16.mxu0 0
        %1218 = vmatmul.mubr.bf16.gmra.mrb[0].mxu0 %v1061
        %v1219 = vpop.f32.mrb[0].mxu0
        %v1220 = vadd.f32 %v1098, %v1219
        %v1221 = vpop.f32.mrb[0].mxu0
        %v1222 = vadd.f32 %v1102, %v1221
        %v1223 = vpop.f32.mrb[0].mxu0
        %v1224 = vadd.f32 %v1098, %v1223
        %v1225 = vpop.f32.mrb[0].mxu0
        %v1226 = vadd.f32 %v1102, %v1225
        %1227 = vmatprep.mubr.bf16.mxu0 0
        %1228 = vmatmul.mubr.bf16.gmra.mrb[0].mxu0 %v1062
        %v1229 = vpop.f32.mrb[0].mxu0
        %v1230 = vadd.f32 %v1098, %v1229
        %v1231 = vpop.f32.mrb[0].mxu0
        %v1232 = vadd.f32 %v1102, %v1231
        %v1233 = vpop.f32.mrb[0].mxu0
        %v1234 = vadd.f32 %v1098, %v1233
        %v1235 = vpop.f32.mrb[0].mxu0
        %v1236 = vadd.f32 %v1102, %v1235
        %1237 = vmatprep.mubr.bf16.mxu0 0
        %1238 = vmatmul.mubr.bf16.gmra.mrb[0].mxu0 %v1063
        %v1239 = vpop.f32.mrb[0].mxu0
        %v1240 = vadd.f32 %v1098, %v1239
        %v1241 = vpop.f32.mrb[0].mxu0
        %v1242 = vadd.f32 %v1102, %v1241
        %v1243 = vpop.f32.mrb[0].mxu0
        %v1244 = vadd.f32 %v1098, %v1243
        %v1245 = vpop.f32.mrb[0].mxu0
        %v1246 = vadd.f32 %v1102, %v1245
        %1247 = vmatprep.mubr.bf16.mxu0 0
        %1248 = vmatmul.mubr.bf16.gmra.mrb[0].mxu0 %v1064
        %v1249 = vpop.f32.mrb[0].mxu0
        %v1250 = vadd.f32 %v1098, %v1249
        %v1251 = vpop.f32.mrb[0].mxu0
        %v1252 = vadd.f32 %v1102, %v1251
        %v1253 = vpop.f32.mrb[0].mxu0
        %v1254 = vadd.f32 %v1098, %v1253
        %v1255 = vpop.f32.mrb[0].mxu0
        %v1256 = vadd.f32 %v1102, %v1255
        %1257 = vmatprep.mubr.bf16.mxu0 0
        %1258 = vmatmul.mubr.bf16.gmra.mrb[0].mxu0 %v1065
        %v1259 = vpop.f32.mrb[0].mxu0
        %v1260 = vadd.f32 %v1098, %v1259
        %v1261 = vpop.f32.mrb[0].mxu0
        %v1262 = vadd.f32 %v1102, %v1261
        %v1263 = vpop.f32.mrb[0].mxu0
        %v1264 = vadd.f32 %v1098, %v1263
        %v1265 = vpop.f32.mrb[0].mxu0
        %v1266 = vadd.f32 %v1102, %v1265
        %1267 = vmatprep.mubr.bf16.mxu0 0
        %1268 = vmatmul.mubr.bf16.gmra.mrb[0].mxu0 %v1066
        %v1269 = vpop.f32.mrb[0].mxu0
        %v1270 = vadd.f32 %v1098, %v1269
        %v1271 = vpop.f32.mrb[0].mxu0
        %v1272 = vadd.f32 %v1102, %v1271
        %v1273 = vpop.f32.mrb[0].mxu0
        %v1274 = vadd.f32 %v1098, %v1273
        %v1275 = vpop.f32.mrb[0].mxu0
        %v1276 = vadd.f32 %v1102, %v1275
        %1277 = vmatprep.mubr.bf16.mxu0 0
        %1278 = vmatmul.mubr.bf16.gmra.mrb[0].mxu0 %v1067
        %v1279 = vpop.f32.mrb[0].mxu0
        %v1280 = vadd.f32 %v1098, %v1279
        %v1281 = vpop.f32.mrb[0].mxu0
        %v1282 = vadd.f32 %v1102, %v1281
        %v1283 = vpop.f32.mrb[0].mxu0
        %v1284 = vadd.f32 %v1098, %v1283
        %v1285 = vpop.f32.mrb[0].mxu0
        %v1286 = vadd.f32 %v1102, %v1285
        %1287 = vmatprep.mubr.bf16.mxu0 0
        %1288 = vmatmul.mubr.bf16.gmra.mrb[0].mxu0 %v1068
        %v1289 = vpop.f32.mrb[0].mxu0
        %v1290 = vadd.f32 %v1098, %v1289
        %v1291 = vpop.f32.mrb[0].mxu0
        %v1292 = vadd.f32 %v1102, %v1291
        %v1293 = vpop.f32.mrb[0].mxu0
        %v1294 = vadd.f32 %v1098, %v1293
        %v1295 = vpop.f32.mrb[0].mxu0
        %v1296 = vadd.f32 %v1102, %v1295
        %1297 = vmatprep.mubr.bf16.mxu0 0
        %1298 = vmatmul.mubr.bf16.gmra.mrb[0].mxu0 %v1069
        %v1299 = vpop.f32.mrb[0].mxu0
        %v1300 = vadd.f32 %v1098, %v1299
        %v1301 = vpop.f32.mrb[0].mxu0
        %v1302 = vadd.f32 %v1102, %v1301
        %v1303 = vpop.f32.mrb[0].mxu0
        %v1304 = vadd.f32 %v1098, %v1303
        %v1305 = vpop.f32.mrb[0].mxu0
        %v1306 = vadd.f32 %v1102, %v1305
        %1307 = vmatprep.mubr.bf16.mxu0 0
        %1308 = vmatmul.mubr.bf16.gmra.mrb[0].mxu0 %v1070
        %v1309 = vpop.f32.mrb[0].mxu0
        %v1310 = vadd.f32 %v1098, %v1309
        %v1311 = vpop.f32.mrb[0].mxu0
        %v1312 = vadd.f32 %v1102, %v1311
        %v1313 = vpop.f32.mrb[0].mxu0
        %v1314 = vadd.f32 %v1098, %v1313
        %v1315 = vpop.f32.mrb[0].mxu0
        %v1316 = vadd.f32 %v1102, %v1315
        %1317 = vmatprep.mubr.bf16.mxu0 0
        %1318 = vmatmul.mubr.bf16.gmra.mrb[0].mxu0 %v1071
        %v1319 = vpop.f32.mrb[0].mxu0
        %v1320 = vadd.f32 %v1098, %v1319
        %v1321 = vpop.f32.mrb[0].mxu0
        %v1322 = vadd.f32 %v1102, %v1321
        %v1323 = vpop.f32.mrb[0].mxu0
        %v1324 = vadd.f32 %v1098, %v1323
        %v1325 = vpop.f32.mrb[0].mxu0
        %v1326 = vadd.f32 %v1102, %v1325
        %1327 = vmatprep.mubr.bf16.mxu0 0
        %1328 = vmatmul.mubr.bf16.gmra.mrb[0].mxu0 %v1072
        %v1329 = vpop.f32.mrb[0].mxu0
        %v1330 = vadd.f32 %v1098, %v1329
        %v1331 = vpop.f32.mrb[0].mxu0
        %v1332 = vadd.f32 %v1102, %v1331
        %v1333 = vpop.f32.mrb[0].mxu0
        %v1334 = vadd.f32 %v1098, %v1333
        %v1335 = vpop.f32.mrb[0].mxu0
        %v1336 = vadd.f32 %v1102, %v1335
        %1337 = vmatprep.mubr.bf16.mxu0 0
        %1338 = vmatmul.mubr.bf16.gmra.mrb[0].mxu0 %v1073
        %v1339 = vpop.f32.mrb[0].mxu0
        %v1340 = vadd.f32 %v1098, %v1339
        %v1341 = vpop.f32.mrb[0].mxu0
        %v1342 = vadd.f32 %v1102, %v1341
        %v1343 = vpop.f32.mrb[0].mxu0
        %v1344 = vadd.f32 %v1098, %v1343
        %v1345 = vpop.f32.mrb[0].mxu0
        %v1346 = vadd.f32 %v1102, %v1345
        %1347 = vmatprep.mubr.bf16.mxu0 0
        %1348 = vmatmul.mubr.bf16.gmra.mrb[0].mxu0 %v1074
        %v1349 = vpop.f32.mrb[0].mxu0
        %v1350 = vadd.f32 %v1098, %v1349
        %v1351 = vpop.f32.mrb[0].mxu0
        %v1352 = vadd.f32 %v1102, %v1351
        %v1353 = vpop.f32.mrb[0].mxu0
        %v1354 = vadd.f32 %v1098, %v1353
        %v1355 = vpop.f32.mrb[0].mxu0
        %v1356 = vadd.f32 %v1102, %v1355
        %1357 = vmatprep.mubr.bf16.mxu0 0
        %1358 = vmatmul.mubr.bf16.gmra.mrb[0].mxu0 %v1075
        %v1359 = vpop.f32.mrb[0].mxu0
        %v1360 = vadd.f32 %v1098, %v1359
        %v1361 = vpop.f32.mrb[0].mxu0
        %v1362 = vadd.f32 %v1102, %v1361
        %v1363 = vpop.f32.mrb[0].mxu0
        %v1364 = vadd.f32 %v1098, %v1363
        %v1365 = vpop.f32.mrb[0].mxu0
        %v1366 = vadd.f32 %v1102, %v1365
        %1367 = vmatprep.mubr.bf16.mxu0 0
        %1368 = vmatmul.mubr.bf16.gmra.mrb[0].mxu0 %v1076
        %v1369 = vpop.f32.mrb[0].mxu0
        %v1370 = vadd.f32 %v1098, %v1369
        %v1371 = vpop.f32.mrb[0].mxu0
        %v1372 = vadd.f32 %v1102, %v1371
        %v1373 = vpop.f32.mrb[0].mxu0
        %v1374 = vadd.f32 %v1098, %v1373
        %v1375 = vpop.f32.mrb[0].mxu0
        %v1376 = vadd.f32 %v1102, %v1375
        %1377 = vdwg.mxu0
        %v1378 = vpack.c.bf16 %v1224, %v1220
        %v1379 = vpack.c.bf16 %v1226, %v1222
        %v1380 = vpack.c.bf16 %v1234, %v1230
        %v1381 = vpack.c.bf16 %v1236, %v1232
        %v1382 = vpack.c.bf16 %v1244, %v1240
        %v1383 = vpack.c.bf16 %v1246, %v1242
        %v1384 = vpack.c.bf16 %v1254, %v1250
        %v1385 = vpack.c.bf16 %v1256, %v1252
        %v1386 = vpack.c.bf16 %v1264, %v1260
        %v1387 = vpack.c.bf16 %v1266, %v1262
        %v1388 = vpack.c.bf16 %v1274, %v1270
        %v1389 = vpack.c.bf16 %v1276, %v1272
        %v1390 = vpack.c.bf16 %v1284, %v1280
        %v1391 = vpack.c.bf16 %v1286, %v1282
        %v1392 = vpack.c.bf16 %v1294, %v1290
        %v1393 = vpack.c.bf16 %v1296, %v1292
        %v1394 = vpack.c.bf16 %v1304, %v1300
        %v1395 = vpack.c.bf16 %v1306, %v1302
        %v1396 = vpack.c.bf16 %v1314, %v1310
        %v1397 = vpack.c.bf16 %v1316, %v1312
        %v1398 = vpack.c.bf16 %v1324, %v1320
        %v1399 = vpack.c.bf16 %v1326, %v1322
        %v1400 = vpack.c.bf16 %v1334, %v1330
        %v1401 = vpack.c.bf16 %v1336, %v1332
        %v1402 = vpack.c.bf16 %v1344, %v1340
        %v1403 = vpack.c.bf16 %v1346, %v1342
        %v1404 = vpack.c.bf16 %v1354, %v1350
        %v1405 = vpack.c.bf16 %v1356, %v1352
        %v1406 = vpack.c.bf16 %v1364, %v1360
        %v1407 = vpack.c.bf16 %v1366, %v1362
        %v1408 = vpack.c.bf16 %v1374, %v1370
        %v1409 = vpack.c.bf16 %v1376, %v1372
        %v1410 = vld [vmem:[#allocation8] sm:$0xf]
        %v1411 = vld [vmem:[#allocation8 + $0x4] sm:$0xf]
        %v1412 = vld [vmem:[#allocation8 + $0x8] sm:$0xf]
        %v1413 = vld [vmem:[#allocation8 + $0xc] sm:$0xf]
        %v1414 = vld [vmem:[#allocation8 + $0x10] sm:$0xf]
        %v1415 = vld [vmem:[#allocation8 + $0x14] sm:$0xf]
        %v1416 = vld [vmem:[#allocation8 + $0x18] sm:$0xf]
        %v1417 = vld [vmem:[#allocation8 + $0x1c] sm:$0xf]
        %v1418 = vld [vmem:[#allocation8 + $0x20] sm:$0xf]
        %v1419 = vld [vmem:[#allocation8 + $0x24] sm:$0xf]
        %v1420 = vld [vmem:[#allocation8 + $0x28] sm:$0xf]
        %v1421 = vld [vmem:[#allocation8 + $0x2c] sm:$0xf]
        %v1422 = vld [vmem:[#allocation8 + $0x30] sm:$0xf]
        %v1423 = vld [vmem:[#allocation8 + $0x34] sm:$0xf]
        %v1424 = vld [vmem:[#allocation8 + $0x38] sm:$0xf]
        %v1425 = vld [vmem:[#allocation8 + $0x3c] sm:$0xf]
        %v1426 = vld [vmem:[#allocation8 + $0x40] sm:$0xf]
        %v1427 = vld [vmem:[#allocation8 + $0x44] sm:$0xf]
        %v1428 = vld [vmem:[#allocation8 + $0x48] sm:$0xf]
        %v1429 = vld [vmem:[#allocation8 + $0x4c] sm:$0xf]
        %v1430 = vld [vmem:[#allocation8 + $0x50] sm:$0xf]
        %v1431 = vld [vmem:[#allocation8 + $0x54] sm:$0xf]
        %v1432 = vld [vmem:[#allocation8 + $0x58] sm:$0xf]
        %v1433 = vld [vmem:[#allocation8 + $0x5c] sm:$0xf]
        %v1434 = vld [vmem:[#allocation8 + $0x60] sm:$0xf]
        %v1435 = vld [vmem:[#allocation8 + $0x64] sm:$0xf]
        %v1436 = vld [vmem:[#allocation8 + $0x68] sm:$0xf]
        %v1437 = vld [vmem:[#allocation8 + $0x6c] sm:$0xf]
        %v1438 = vld [vmem:[#allocation8 + $0x70] sm:$0xf]
        %v1439 = vld [vmem:[#allocation8 + $0x74] sm:$0xf]
        %v1440 = vld [vmem:[#allocation8 + $0x78] sm:$0xf]
        %v1441 = vld [vmem:[#allocation8 + $0x7c] sm:$0xf]
        %v1442 = vld [vmem:[%s6] sm:$0x1]
        %v1444 = vlaneseq
        %v1445 = vshrl.u32 %v1444, 7
        %v1446 = vsub.s32 0, %v1445
        %v1447 = vrot.slane %v1442, %v1446
        %v1481 = vunpack.c.l.b16 %v1410
        %v1482 = vunpack.c.l.b16 %v1411
        %v1483 = vunpack.c.l.b16 %v1412
        %v1484 = vunpack.c.l.b16 %v1413
        %v1485 = vunpack.c.l.b16 %v1414
        %v1486 = vunpack.c.l.b16 %v1415
        %v1487 = vunpack.c.l.b16 %v1416
        %v1488 = vunpack.c.l.b16 %v1417
        %v1489 = vunpack.c.l.b16 %v1418
        %v1490 = vunpack.c.l.b16 %v1419
        %v1491 = vunpack.c.l.b16 %v1420
        %v1492 = vunpack.c.l.b16 %v1421
        %v1493 = vunpack.c.l.b16 %v1422
        %v1494 = vunpack.c.l.b16 %v1423
        %v1495 = vunpack.c.l.b16 %v1424
        %v1496 = vunpack.c.l.b16 %v1425
        %v1497 = vunpack.c.l.b16 %v1426
        %v1498 = vunpack.c.l.b16 %v1427
        %v1499 = vunpack.c.l.b16 %v1428
        %v1500 = vunpack.c.l.b16 %v1429
        %v1501 = vunpack.c.l.b16 %v1430
        %v1502 = vunpack.c.l.b16 %v1431
        %v1503 = vunpack.c.l.b16 %v1432
        %v1504 = vunpack.c.l.b16 %v1433
        %v1505 = vunpack.c.l.b16 %v1434
        %v1506 = vunpack.c.l.b16 %v1435
        %v1507 = vunpack.c.l.b16 %v1436
        %v1508 = vunpack.c.l.b16 %v1437
        %v1509 = vunpack.c.l.b16 %v1438
        %v1510 = vunpack.c.l.b16 %v1439
        %v1511 = vunpack.c.l.b16 %v1440
        %v1512 = vunpack.c.l.b16 %v1441
        %v1513 = vpack.c.b16 %v1482, %v1481
        %v1514 = vpack.c.b16 %v1484, %v1483
        %v1515 = vpack.c.b16 %v1486, %v1485
        %v1516 = vpack.c.b16 %v1488, %v1487
        %v1517 = vpack.c.b16 %v1490, %v1489
        %v1518 = vpack.c.b16 %v1492, %v1491
        %v1519 = vpack.c.b16 %v1494, %v1493
        %v1520 = vpack.c.b16 %v1496, %v1495
        %v1521 = vpack.c.b16 %v1498, %v1497
        %v1522 = vpack.c.b16 %v1500, %v1499
        %v1523 = vpack.c.b16 %v1502, %v1501
        %v1524 = vpack.c.b16 %v1504, %v1503
        %v1525 = vpack.c.b16 %v1506, %v1505
        %v1526 = vpack.c.b16 %v1508, %v1507
        %v1527 = vpack.c.b16 %v1510, %v1509
        %v1528 = vpack.c.b16 %v1512, %v1511
        %1545 = vmatprep.subr.bf16.mxu0 0
        %1546 = vmatpush1.bf16.msra.mxu0 %v1513
        %1547 = vmatprep.subr.bf16.mxu0 0
        %1548 = vmatpush1.bf16.msra.mxu0 %v1514
        %1549 = vmatprep.subr.bf16.mxu0 0
        %1550 = vmatpush1.bf16.msra.mxu0 %v1515
        %1551 = vmatprep.subr.bf16.mxu0 0
        %1552 = vmatpush1.bf16.msra.mxu0 %v1516
        %1553 = vmatprep.subr.bf16.mxu0 0
        %1554 = vmatpush1.bf16.msra.mxu0 %v1517
        %1555 = vmatprep.subr.bf16.mxu0 0
        %1556 = vmatpush1.bf16.msra.mxu0 %v1518
        %1557 = vmatprep.subr.bf16.mxu0 0
        %1558 = vmatpush1.bf16.msra.mxu0 %v1519
        %1559 = vmatprep.subr.bf16.mxu0 0
        %1560 = vmatpush1.bf16.msra.mxu0 %v1520
        %1561 = vmatprep.subr.bf16.mxu0 0
        %1562 = vmatpush1.bf16.msra.mxu0 %v1521
        %1563 = vmatprep.subr.bf16.mxu0 0
        %1564 = vmatpush1.bf16.msra.mxu0 %v1522
        %1565 = vmatprep.subr.bf16.mxu0 0
        %1566 = vmatpush1.bf16.msra.mxu0 %v1523
        %1567 = vmatprep.subr.bf16.mxu0 0
        %1568 = vmatpush1.bf16.msra.mxu0 %v1524
        %1569 = vmatprep.subr.bf16.mxu0 0
        %1570 = vmatpush1.bf16.msra.mxu0 %v1525
        %1571 = vmatprep.subr.bf16.mxu0 0
        %1572 = vmatpush1.bf16.msra.mxu0 %v1526
        %1573 = vmatprep.subr.bf16.mxu0 0
        %1574 = vmatpush1.bf16.msra.mxu0 %v1527
        %1575 = vmatprep.subr.bf16.mxu0 0
        %1576 = vmatpush1.bf16.msra.mxu0 %v1528
        %1577 = vmatprep.mubr.bf16.mxu0 %v1379
        %1578 = vmatmul.mubr.bf16.gmra.mrb[0].mxu0 %v1378
        %v1579 = vpop.f32.mrb[0].mxu0
        %v1580 = vadd.f32 %v1447, %v1579
        %v1581 = vpop.f32.mrb[0].mxu0
        %v1582 = vpop.f32.mrb[0].mxu0
        %v1583 = vadd.f32 %v1447, %v1582
        %v1584 = vpop.f32.mrb[0].mxu0
        %1585 = vmatprep.mubr.bf16.mxu0 %v1381
        %1586 = vmatmul.mubr.bf16.gmra.mrb[0].mxu0 %v1380
        %v1587 = vpop.f32.mrb[0].mxu0
        %v1588 = vadd.f32 %v1447, %v1587
        %v1589 = vpop.f32.mrb[0].mxu0
        %v1590 = vpop.f32.mrb[0].mxu0
        %v1591 = vadd.f32 %v1447, %v1590
        %v1592 = vpop.f32.mrb[0].mxu0
        %1593 = vmatprep.mubr.bf16.mxu0 %v1383
        %1594 = vmatmul.mubr.bf16.gmra.mrb[0].mxu0 %v1382
        %v1595 = vpop.f32.mrb[0].mxu0
        %v1596 = vadd.f32 %v1447, %v1595
        %v1597 = vpop.f32.mrb[0].mxu0
        %v1598 = vpop.f32.mrb[0].mxu0
        %v1599 = vadd.f32 %v1447, %v1598
        %v1600 = vpop.f32.mrb[0].mxu0
        %1601 = vmatprep.mubr.bf16.mxu0 %v1385
        %1602 = vmatmul.mubr.bf16.gmra.mrb[0].mxu0 %v1384
        %v1603 = vpop.f32.mrb[0].mxu0
        %v1604 = vadd.f32 %v1447, %v1603
        %v1605 = vpop.f32.mrb[0].mxu0
        %v1606 = vpop.f32.mrb[0].mxu0
        %v1607 = vadd.f32 %v1447, %v1606
        %v1608 = vpop.f32.mrb[0].mxu0
        %1609 = vmatprep.mubr.bf16.mxu0 %v1387
        %1610 = vmatmul.mubr.bf16.gmra.mrb[0].mxu0 %v1386
        %v1611 = vpop.f32.mrb[0].mxu0
        %v1612 = vadd.f32 %v1447, %v1611
        %v1613 = vpop.f32.mrb[0].mxu0
        %v1614 = vpop.f32.mrb[0].mxu0
        %v1615 = vadd.f32 %v1447, %v1614
        %v1616 = vpop.f32.mrb[0].mxu0
        %1617 = vmatprep.mubr.bf16.mxu0 %v1389
        %1618 = vmatmul.mubr.bf16.gmra.mrb[0].mxu0 %v1388
        %v1619 = vpop.f32.mrb[0].mxu0
        %v1620 = vadd.f32 %v1447, %v1619
        %v1621 = vpop.f32.mrb[0].mxu0
        %v1622 = vpop.f32.mrb[0].mxu0
        %v1623 = vadd.f32 %v1447, %v1622
        %v1624 = vpop.f32.mrb[0].mxu0
        %1625 = vmatprep.mubr.bf16.mxu0 %v1391
        %1626 = vmatmul.mubr.bf16.gmra.mrb[0].mxu0 %v1390
        %v1627 = vpop.f32.mrb[0].mxu0
        %v1628 = vadd.f32 %v1447, %v1627
        %v1629 = vpop.f32.mrb[0].mxu0
        %v1630 = vpop.f32.mrb[0].mxu0
        %v1631 = vadd.f32 %v1447, %v1630
        %v1632 = vpop.f32.mrb[0].mxu0
        %1633 = vmatprep.mubr.bf16.mxu0 %v1393
        %1634 = vmatmul.mubr.bf16.gmra.mrb[0].mxu0 %v1392
        %v1635 = vpop.f32.mrb[0].mxu0
        %v1636 = vadd.f32 %v1447, %v1635
        %v1637 = vpop.f32.mrb[0].mxu0
        %v1638 = vpop.f32.mrb[0].mxu0
        %v1639 = vadd.f32 %v1447, %v1638
        %v1640 = vpop.f32.mrb[0].mxu0
        %1641 = vmatprep.mubr.bf16.mxu0 %v1395
        %1642 = vmatmul.mubr.bf16.gmra.mrb[0].mxu0 %v1394
        %v1643 = vpop.f32.mrb[0].mxu0
        %v1644 = vadd.f32 %v1447, %v1643
        %v1645 = vpop.f32.mrb[0].mxu0
        %v1646 = vpop.f32.mrb[0].mxu0
        %v1647 = vadd.f32 %v1447, %v1646
        %v1648 = vpop.f32.mrb[0].mxu0
        %1649 = vmatprep.mubr.bf16.mxu0 %v1397
        %1650 = vmatmul.mubr.bf16.gmra.mrb[0].mxu0 %v1396
        %v1651 = vpop.f32.mrb[0].mxu0
        %v1652 = vadd.f32 %v1447, %v1651
        %v1653 = vpop.f32.mrb[0].mxu0
        %v1654 = vpop.f32.mrb[0].mxu0
        %v1655 = vadd.f32 %v1447, %v1654
        %v1656 = vpop.f32.mrb[0].mxu0
        %1657 = vmatprep.mubr.bf16.mxu0 %v1399
        %1658 = vmatmul.mubr.bf16.gmra.mrb[0].mxu0 %v1398
        %v1659 = vpop.f32.mrb[0].mxu0
        %v1660 = vadd.f32 %v1447, %v1659
        %v1661 = vpop.f32.mrb[0].mxu0
        %v1662 = vpop.f32.mrb[0].mxu0
        %v1663 = vadd.f32 %v1447, %v1662
        %v1664 = vpop.f32.mrb[0].mxu0
        %1665 = vmatprep.mubr.bf16.mxu0 %v1401
        %1666 = vmatmul.mubr.bf16.gmra.mrb[0].mxu0 %v1400
        %v1667 = vpop.f32.mrb[0].mxu0
        %v1668 = vadd.f32 %v1447, %v1667
        %v1669 = vpop.f32.mrb[0].mxu0
        %v1670 = vpop.f32.mrb[0].mxu0
        %v1671 = vadd.f32 %v1447, %v1670
        %v1672 = vpop.f32.mrb[0].mxu0
        %1673 = vmatprep.mubr.bf16.mxu0 %v1403
        %1674 = vmatmul.mubr.bf16.gmra.mrb[0].mxu0 %v1402
        %v1675 = vpop.f32.mrb[0].mxu0
        %v1676 = vadd.f32 %v1447, %v1675
        %v1677 = vpop.f32.mrb[0].mxu0
        %v1678 = vpop.f32.mrb[0].mxu0
        %v1679 = vadd.f32 %v1447, %v1678
        %v1680 = vpop.f32.mrb[0].mxu0
        %1681 = vmatprep.mubr.bf16.mxu0 %v1405
        %1682 = vmatmul.mubr.bf16.gmra.mrb[0].mxu0 %v1404
        %v1683 = vpop.f32.mrb[0].mxu0
        %v1684 = vadd.f32 %v1447, %v1683
        %v1685 = vpop.f32.mrb[0].mxu0
        %v1686 = vpop.f32.mrb[0].mxu0
        %v1687 = vadd.f32 %v1447, %v1686
        %v1688 = vpop.f32.mrb[0].mxu0
        %1689 = vmatprep.mubr.bf16.mxu0 %v1407
        %1690 = vmatmul.mubr.bf16.gmra.mrb[0].mxu0 %v1406
        %v1691 = vpop.f32.mrb[0].mxu0
        %v1692 = vadd.f32 %v1447, %v1691
        %v1693 = vpop.f32.mrb[0].mxu0
        %v1694 = vpop.f32.mrb[0].mxu0
        %v1695 = vadd.f32 %v1447, %v1694
        %v1696 = vpop.f32.mrb[0].mxu0
        %1697 = vmatprep.mubr.bf16.mxu0 %v1409
        %1698 = vmatmul.mubr.bf16.gmra.mrb[0].mxu0 %v1408
        %v1699 = vpop.f32.mrb[0].mxu0
        %v1700 = vadd.f32 %v1447, %v1699
        %v1701 = vpop.f32.mrb[0].mxu0
        %v1702 = vpop.f32.mrb[0].mxu0
        %v1703 = vadd.f32 %v1447, %v1702
        %v1704 = vpop.f32.mrb[0].mxu0
        %1705 = vdwg.mxu0
        %v1706 = vsub.f32 0.0, %v1580
        %v1707 = vsub.f32 0.0, %v1583
        %v1708 = vsub.f32 0.0, %v1588
        %v1709 = vsub.f32 0.0, %v1591
        %v1710 = vsub.f32 0.0, %v1596
        %v1711 = vsub.f32 0.0, %v1599
        %v1712 = vsub.f32 0.0, %v1604
        %v1713 = vsub.f32 0.0, %v1607
        %v1714 = vsub.f32 0.0, %v1612
        %v1715 = vsub.f32 0.0, %v1615
        %v1716 = vsub.f32 0.0, %v1620
        %v1717 = vsub.f32 0.0, %v1623
        %v1718 = vsub.f32 0.0, %v1628
        %v1719 = vsub.f32 0.0, %v1631
        %v1720 = vsub.f32 0.0, %v1636
        %v1721 = vsub.f32 0.0, %v1639
        %v1722 = vsub.f32 0.0, %v1644
        %v1723 = vsub.f32 0.0, %v1647
        %v1724 = vsub.f32 0.0, %v1652
        %v1725 = vsub.f32 0.0, %v1655
        %v1726 = vsub.f32 0.0, %v1660
        %v1727 = vsub.f32 0.0, %v1663
        %v1728 = vsub.f32 0.0, %v1668
        %v1729 = vsub.f32 0.0, %v1671
        %v1730 = vsub.f32 0.0, %v1676
        %v1731 = vsub.f32 0.0, %v1679
        %v1732 = vsub.f32 0.0, %v1684
        %v1733 = vsub.f32 0.0, %v1687
        %v1734 = vsub.f32 0.0, %v1692
        %v1735 = vsub.f32 0.0, %v1695
        %v1736 = vsub.f32 0.0, %v1700
        %v1737 = vsub.f32 0.0, %v1703
        %v1738 = vmul.f32 %v1706, 1.442695
        %v1739 = vpow.pop %v1738
        %v1740 = vmul.f32 %v1707, 1.442695
        %v1741 = vpow.pop %v1740
        %v1742 = vmul.f32 %v1708, 1.442695
        %v1743 = vpow.pop %v1742
        %v1744 = vmul.f32 %v1709, 1.442695
        %v1745 = vpow.pop %v1744
        %v1746 = vmul.f32 %v1710, 1.442695
        %v1747 = vpow.pop %v1746
        %v1748 = vmul.f32 %v1711, 1.442695
        %v1749 = vpow.pop %v1748
        %v1750 = vmul.f32 %v1712, 1.442695
        %v1751 = vpow.pop %v1750
        %v1752 = vmul.f32 %v1713, 1.442695
        %v1753 = vpow.pop %v1752
        %v1754 = vmul.f32 %v1714, 1.442695
        %v1755 = vpow.pop %v1754
        %v1756 = vmul.f32 %v1715, 1.442695
        %v1757 = vpow.pop %v1756
        %v1758 = vmul.f32 %v1716, 1.442695
        %v1759 = vpow.pop %v1758
        %v1760 = vmul.f32 %v1717, 1.442695
        %v1761 = vpow.pop %v1760
        %v1762 = vmul.f32 %v1718, 1.442695
        %v1763 = vpow.pop %v1762
        %v1764 = vmul.f32 %v1719, 1.442695
        %v1765 = vpow.pop %v1764
        %v1766 = vmul.f32 %v1720, 1.442695
        %v1767 = vpow.pop %v1766
        %v1768 = vmul.f32 %v1721, 1.442695
        %v1769 = vpow.pop %v1768
        %v1770 = vmul.f32 %v1722, 1.442695
        %v1771 = vpow.pop %v1770
        %v1772 = vmul.f32 %v1723, 1.442695
        %v1773 = vpow.pop %v1772
        %v1774 = vmul.f32 %v1724, 1.442695
        %v1775 = vpow.pop %v1774
        %v1776 = vmul.f32 %v1725, 1.442695
        %v1777 = vpow.pop %v1776
        %v1778 = vmul.f32 %v1726, 1.442695
        %v1779 = vpow.pop %v1778
        %v1780 = vmul.f32 %v1727, 1.442695
        %v1781 = vpow.pop %v1780
        %v1782 = vmul.f32 %v1728, 1.442695
        %v1783 = vpow.pop %v1782
        %v1784 = vmul.f32 %v1729, 1.442695
        %v1785 = vpow.pop %v1784
        %v1786 = vmul.f32 %v1730, 1.442695
        %v1787 = vpow.pop %v1786
        %v1788 = vmul.f32 %v1731, 1.442695
        %v1789 = vpow.pop %v1788
        %v1790 = vmul.f32 %v1732, 1.442695
        %v1791 = vpow.pop %v1790
        %v1792 = vmul.f32 %v1733, 1.442695
        %v1793 = vpow.pop %v1792
        %v1794 = vmul.f32 %v1734, 1.442695
        %v1795 = vpow.pop %v1794
        %v1796 = vmul.f32 %v1735, 1.442695
        %v1797 = vpow.pop %v1796
        %v1798 = vmul.f32 %v1736, 1.442695
        %v1799 = vpow.pop %v1798
        %v1800 = vmul.f32 %v1737, 1.442695
        %v1801 = vpow.pop %v1800
        %v1802 = vadd.f32 %v1739, 1.0
        %v1803 = vadd.f32 %v1741, 1.0
        %v1804 = vadd.f32 %v1743, 1.0
        %v1805 = vadd.f32 %v1745, 1.0
        %v1806 = vadd.f32 %v1747, 1.0
        %v1807 = vadd.f32 %v1749, 1.0
        %v1808 = vadd.f32 %v1751, 1.0
        %v1809 = vadd.f32 %v1753, 1.0
        %v1810 = vadd.f32 %v1755, 1.0
        %v1811 = vadd.f32 %v1757, 1.0
        %v1812 = vadd.f32 %v1759, 1.0
        %v1813 = vadd.f32 %v1761, 1.0
        %v1814 = vadd.f32 %v1763, 1.0
        %v1815 = vadd.f32 %v1765, 1.0
        %v1816 = vadd.f32 %v1767, 1.0
        %v1817 = vadd.f32 %v1769, 1.0
        %v1818 = vadd.f32 %v1771, 1.0
        %v1819 = vadd.f32 %v1773, 1.0
        %v1820 = vadd.f32 %v1775, 1.0
        %v1821 = vadd.f32 %v1777, 1.0
        %v1822 = vadd.f32 %v1779, 1.0
        %v1823 = vadd.f32 %v1781, 1.0
        %v1824 = vadd.f32 %v1783, 1.0
        %v1825 = vadd.f32 %v1785, 1.0
        %v1826 = vadd.f32 %v1787, 1.0
        %v1827 = vadd.f32 %v1789, 1.0
        %v1828 = vadd.f32 %v1791, 1.0
        %v1829 = vadd.f32 %v1793, 1.0
        %v1830 = vadd.f32 %v1795, 1.0
        %v1831 = vadd.f32 %v1797, 1.0
        %v1832 = vadd.f32 %v1799, 1.0
        %v1833 = vadd.f32 %v1801, 1.0
        %v1834 = vrcp.pop %v1802
        %v1835 = vrcp.pop %v1803
        %v1836 = vrcp.pop %v1804
        %v1837 = vrcp.pop %v1805
        %v1838 = vrcp.pop %v1806
        %v1839 = vrcp.pop %v1807
        %v1840 = vrcp.pop %v1808
        %v1841 = vrcp.pop %v1809
        %v1842 = vrcp.pop %v1810
        %v1843 = vrcp.pop %v1811
        %v1844 = vrcp.pop %v1812
        %v1845 = vrcp.pop %v1813
        %v1846 = vrcp.pop %v1814
        %v1847 = vrcp.pop %v1815
        %v1848 = vrcp.pop %v1816
        %v1849 = vrcp.pop %v1817
        %v1850 = vrcp.pop %v1818
        %v1851 = vrcp.pop %v1819
        %v1852 = vrcp.pop %v1820
        %v1853 = vrcp.pop %v1821
        %v1854 = vrcp.pop %v1822
        %v1855 = vrcp.pop %v1823
        %v1856 = vrcp.pop %v1824
        %v1857 = vrcp.pop %v1825
        %v1858 = vrcp.pop %v1826
        %v1859 = vrcp.pop %v1827
        %v1860 = vrcp.pop %v1828
        %v1861 = vrcp.pop %v1829
        %v1862 = vrcp.pop %v1830
        %v1863 = vrcp.pop %v1831
        %v1864 = vrcp.pop %v1832
        %v1865 = vrcp.pop %v1833
        %v1866 = vpack.c.bf16 %v1835, %v1834
        %v1867 = vpack.c.bf16 %v1837, %v1836
        %v1868 = vpack.c.bf16 %v1839, %v1838
        %v1869 = vpack.c.bf16 %v1841, %v1840
        %v1870 = vpack.c.bf16 %v1843, %v1842
        %v1871 = vpack.c.bf16 %v1845, %v1844
        %v1872 = vpack.c.bf16 %v1847, %v1846
        %v1873 = vpack.c.bf16 %v1849, %v1848
        %v1874 = vpack.c.bf16 %v1851, %v1850
        %v1875 = vpack.c.bf16 %v1853, %v1852
        %v1876 = vpack.c.bf16 %v1855, %v1854
        %v1877 = vpack.c.bf16 %v1857, %v1856
        %v1878 = vpack.c.bf16 %v1859, %v1858
        %v1879 = vpack.c.bf16 %v1861, %v1860
        %v1880 = vpack.c.bf16 %v1863, %v1862
        %v1881 = vpack.c.bf16 %v1865, %v1864
        %v1882 = vld [vmem:[#allocation10] sm:$0xff]
        %v1883 = vld [vmem:[#allocation10 + $0x8] sm:$0xff]
        %v1884 = vld [vmem:[#allocation10 + $0x10] sm:$0xff]
        %v1885 = vld [vmem:[#allocation10 + $0x18] sm:$0xff]
        %v1886 = vld [vmem:[#allocation10 + $0x20] sm:$0xff]
        %v1887 = vld [vmem:[#allocation10 + $0x28] sm:$0xff]
        %v1888 = vld [vmem:[#allocation10 + $0x30] sm:$0xff]
        %v1889 = vld [vmem:[#allocation10 + $0x38] sm:$0xff]
        %v1890 = vld [vmem:[#allocation10 + $0x40] sm:$0xff]
        %v1891 = vld [vmem:[#allocation10 + $0x48] sm:$0xff]
        %v1892 = vld [vmem:[#allocation10 + $0x50] sm:$0xff]
        %v1893 = vld [vmem:[#allocation10 + $0x58] sm:$0xff]
        %v1894 = vld [vmem:[#allocation10 + $0x60] sm:$0xff]
        %v1895 = vld [vmem:[#allocation10 + $0x68] sm:$0xff]
        %v1896 = vld [vmem:[#allocation10 + $0x70] sm:$0xff]
        %v1897 = vld [vmem:[#allocation10 + $0x78] sm:$0xff]
        %v1898 = vld [vmem:[%s8] sm:$0x3]
        %v1900 = vlaneseq
        %v1901 = vshrl.u32 %v1900, 7
        %v1902 = vsub.s32 0, %v1901
        %v1903 = vrot.slane %v1898, %v1902
        %v1904 = vlaneseq
        %v1905 = vshrl.u32 %v1904, 7
        %v1906 = vsub.s32 1, %v1905
        %v1907 = vrot.slane %v1898, %v1906
        %v1926 = vunpack.c.l.b16 %v1882
        %v1927 = vunpack.c.h.b16 %v1882
        %v1928 = vunpack.c.l.b16 %v1883
        %v1929 = vunpack.c.h.b16 %v1883
        %v1930 = vunpack.c.l.b16 %v1884
        %v1931 = vunpack.c.h.b16 %v1884
        %v1932 = vunpack.c.l.b16 %v1885
        %v1933 = vunpack.c.h.b16 %v1885
        %v1934 = vunpack.c.l.b16 %v1886
        %v1935 = vunpack.c.h.b16 %v1886
        %v1936 = vunpack.c.l.b16 %v1887
        %v1937 = vunpack.c.h.b16 %v1887
        %v1938 = vunpack.c.l.b16 %v1888
        %v1939 = vunpack.c.h.b16 %v1888
        %v1940 = vunpack.c.l.b16 %v1889
        %v1941 = vunpack.c.h.b16 %v1889
        %v1942 = vunpack.c.l.b16 %v1890
        %v1943 = vunpack.c.h.b16 %v1890
        %v1944 = vunpack.c.l.b16 %v1891
        %v1945 = vunpack.c.h.b16 %v1891
        %v1946 = vunpack.c.l.b16 %v1892
        %v1947 = vunpack.c.h.b16 %v1892
        %v1948 = vunpack.c.l.b16 %v1893
        %v1949 = vunpack.c.h.b16 %v1893
        %v1950 = vunpack.c.l.b16 %v1894
        %v1951 = vunpack.c.h.b16 %v1894
        %v1952 = vunpack.c.l.b16 %v1895
        %v1953 = vunpack.c.h.b16 %v1895
        %v1954 = vunpack.c.l.b16 %v1896
        %v1955 = vunpack.c.h.b16 %v1896
        %v1956 = vunpack.c.l.b16 %v1897
        %v1957 = vunpack.c.h.b16 %v1897
        %v1958 = vpack.c.b16 %v1928, %v1926
        %v1959 = vpack.c.b16 %v1929, %v1927
        %v1960 = vpack.c.b16 %v1932, %v1930
        %v1961 = vpack.c.b16 %v1933, %v1931
        %v1962 = vpack.c.b16 %v1936, %v1934
        %v1963 = vpack.c.b16 %v1937, %v1935
        %v1964 = vpack.c.b16 %v1940, %v1938
        %v1965 = vpack.c.b16 %v1941, %v1939
        %v1966 = vpack.c.b16 %v1944, %v1942
        %v1967 = vpack.c.b16 %v1945, %v1943
        %v1968 = vpack.c.b16 %v1948, %v1946
        %v1969 = vpack.c.b16 %v1949, %v1947
        %v1970 = vpack.c.b16 %v1952, %v1950
        %v1971 = vpack.c.b16 %v1953, %v1951
        %v1972 = vpack.c.b16 %v1956, %v1954
        %v1973 = vpack.c.b16 %v1957, %v1955
        %1990 = vmatprep.subr.bf16.mxu0 %v1959
        %1991 = vmatpush1.bf16.msra.mxu0 %v1958
        %1992 = vmatprep.subr.bf16.mxu0 %v1961
        %1993 = vmatpush1.bf16.msra.mxu0 %v1960
        %1994 = vmatprep.subr.bf16.mxu0 %v1963
        %1995 = vmatpush1.bf16.msra.mxu0 %v1962
        %1996 = vmatprep.subr.bf16.mxu0 %v1965
        %1997 = vmatpush1.bf16.msra.mxu0 %v1964
        %1998 = vmatprep.subr.bf16.mxu0 %v1967
        %1999 = vmatpush1.bf16.msra.mxu0 %v1966
        %2000 = vmatprep.subr.bf16.mxu0 %v1969
        %2001 = vmatpush1.bf16.msra.mxu0 %v1968
        %2002 = vmatprep.subr.bf16.mxu0 %v1971
        %2003 = vmatpush1.bf16.msra.mxu0 %v1970
        %2004 = vmatprep.subr.bf16.mxu0 %v1973
        %2005 = vmatpush1.bf16.msra.mxu0 %v1972
        %2006 = vmatprep.subr.bf16.mxu0 0
        %2007 = vmatpush1.bf16.msra.mxu0 0
        %2008 = vmatprep.subr.bf16.mxu0 0
        %2009 = vmatpush1.bf16.msra.mxu0 0
        %2010 = vmatprep.subr.bf16.mxu0 0
        %2011 = vmatpush1.bf16.msra.mxu0 0
        %2012 = vmatprep.subr.bf16.mxu0 0
        %2013 = vmatpush1.bf16.msra.mxu0 0
        %2014 = vmatprep.subr.bf16.mxu0 0
        %2015 = vmatpush1.bf16.msra.mxu0 0
        %2016 = vmatprep.subr.bf16.mxu0 0
        %2017 = vmatpush1.bf16.msra.mxu0 0
        %2018 = vmatprep.subr.bf16.mxu0 0
        %2019 = vmatpush1.bf16.msra.mxu0 0
        %2020 = vmatprep.subr.bf16.mxu0 0
        %2021 = vmatpush1.bf16.msra.mxu0 0
        %2022 = vmatprep.mubr.bf16.mxu0 0
        %2023 = vmatmul.mubr.bf16.gmra.mrb[0].mxu0 %v1866
        %v2024 = vpop.f32.mrb[0].mxu0
        %v2025 = vadd.f32 %v1903, %v2024
        %v2026 = vpop.f32.mrb[0].mxu0
        %v2027 = vadd.f32 %v1907, %v2026
        %v2028 = vpop.f32.mrb[0].mxu0
        %v2029 = vadd.f32 %v1903, %v2028
        %v2030 = vpop.f32.mrb[0].mxu0
        %v2031 = vadd.f32 %v1907, %v2030
        %2032 = vmatprep.mubr.bf16.mxu0 0
        %2033 = vmatmul.mubr.bf16.gmra.mrb[0].mxu0 %v1867
        %v2034 = vpop.f32.mrb[0].mxu0
        %v2035 = vadd.f32 %v1903, %v2034
        %v2036 = vpop.f32.mrb[0].mxu0
        %v2037 = vadd.f32 %v1907, %v2036
        %v2038 = vpop.f32.mrb[0].mxu0
        %v2039 = vadd.f32 %v1903, %v2038
        %v2040 = vpop.f32.mrb[0].mxu0
        %v2041 = vadd.f32 %v1907, %v2040
        %2042 = vmatprep.mubr.bf16.mxu0 0
        %2043 = vmatmul.mubr.bf16.gmra.mrb[0].mxu0 %v1868
        %v2044 = vpop.f32.mrb[0].mxu0
        %v2045 = vadd.f32 %v1903, %v2044
        %v2046 = vpop.f32.mrb[0].mxu0
        %v2047 = vadd.f32 %v1907, %v2046
        %v2048 = vpop.f32.mrb[0].mxu0
        %v2049 = vadd.f32 %v1903, %v2048
        %v2050 = vpop.f32.mrb[0].mxu0
        %v2051 = vadd.f32 %v1907, %v2050
        %2052 = vmatprep.mubr.bf16.mxu0 0
        %2053 = vmatmul.mubr.bf16.gmra.mrb[0].mxu0 %v1869
        %v2054 = vpop.f32.mrb[0].mxu0
        %v2055 = vadd.f32 %v1903, %v2054
        %v2056 = vpop.f32.mrb[0].mxu0
        %v2057 = vadd.f32 %v1907, %v2056
        %v2058 = vpop.f32.mrb[0].mxu0
        %v2059 = vadd.f32 %v1903, %v2058
        %v2060 = vpop.f32.mrb[0].mxu0
        %v2061 = vadd.f32 %v1907, %v2060
        %2062 = vmatprep.mubr.bf16.mxu0 0
        %2063 = vmatmul.mubr.bf16.gmra.mrb[0].mxu0 %v1870
        %v2064 = vpop.f32.mrb[0].mxu0
        %v2065 = vadd.f32 %v1903, %v2064
        %v2066 = vpop.f32.mrb[0].mxu0
        %v2067 = vadd.f32 %v1907, %v2066
        %v2068 = vpop.f32.mrb[0].mxu0
        %v2069 = vadd.f32 %v1903, %v2068
        %v2070 = vpop.f32.mrb[0].mxu0
        %v2071 = vadd.f32 %v1907, %v2070
        %2072 = vmatprep.mubr.bf16.mxu0 0
        %2073 = vmatmul.mubr.bf16.gmra.mrb[0].mxu0 %v1871
        %v2074 = vpop.f32.mrb[0].mxu0
        %v2075 = vadd.f32 %v1903, %v2074
        %v2076 = vpop.f32.mrb[0].mxu0
        %v2077 = vadd.f32 %v1907, %v2076
        %v2078 = vpop.f32.mrb[0].mxu0
        %v2079 = vadd.f32 %v1903, %v2078
        %v2080 = vpop.f32.mrb[0].mxu0
        %v2081 = vadd.f32 %v1907, %v2080
        %2082 = vmatprep.mubr.bf16.mxu0 0
        %2083 = vmatmul.mubr.bf16.gmra.mrb[0].mxu0 %v1872
        %v2084 = vpop.f32.mrb[0].mxu0
        %v2085 = vadd.f32 %v1903, %v2084
        %v2086 = vpop.f32.mrb[0].mxu0
        %v2087 = vadd.f32 %v1907, %v2086
        %v2088 = vpop.f32.mrb[0].mxu0
        %v2089 = vadd.f32 %v1903, %v2088
        %v2090 = vpop.f32.mrb[0].mxu0
        %v2091 = vadd.f32 %v1907, %v2090
        %2092 = vmatprep.mubr.bf16.mxu0 0
        %2093 = vmatmul.mubr.bf16.gmra.mrb[0].mxu0 %v1873
        %v2094 = vpop.f32.mrb[0].mxu0
        %v2095 = vadd.f32 %v1903, %v2094
        %v2096 = vpop.f32.mrb[0].mxu0
        %v2097 = vadd.f32 %v1907, %v2096
        %v2098 = vpop.f32.mrb[0].mxu0
        %v2099 = vadd.f32 %v1903, %v2098
        %v2100 = vpop.f32.mrb[0].mxu0
        %v2101 = vadd.f32 %v1907, %v2100
        %2102 = vmatprep.mubr.bf16.mxu0 0
        %2103 = vmatmul.mubr.bf16.gmra.mrb[0].mxu0 %v1874
        %v2104 = vpop.f32.mrb[0].mxu0
        %v2105 = vadd.f32 %v1903, %v2104
        %v2106 = vpop.f32.mrb[0].mxu0
        %v2107 = vadd.f32 %v1907, %v2106
        %v2108 = vpop.f32.mrb[0].mxu0
        %v2109 = vadd.f32 %v1903, %v2108
        %v2110 = vpop.f32.mrb[0].mxu0
        %v2111 = vadd.f32 %v1907, %v2110
        %2112 = vmatprep.mubr.bf16.mxu0 0
        %2113 = vmatmul.mubr.bf16.gmra.mrb[0].mxu0 %v1875
        %v2114 = vpop.f32.mrb[0].mxu0
        %v2115 = vadd.f32 %v1903, %v2114
        %v2116 = vpop.f32.mrb[0].mxu0
        %v2117 = vadd.f32 %v1907, %v2116
        %v2118 = vpop.f32.mrb[0].mxu0
        %v2119 = vadd.f32 %v1903, %v2118
        %v2120 = vpop.f32.mrb[0].mxu0
        %v2121 = vadd.f32 %v1907, %v2120
        %2122 = vmatprep.mubr.bf16.mxu0 0
        %2123 = vmatmul.mubr.bf16.gmra.mrb[0].mxu0 %v1876
        %v2124 = vpop.f32.mrb[0].mxu0
        %v2125 = vadd.f32 %v1903, %v2124
        %v2126 = vpop.f32.mrb[0].mxu0
        %v2127 = vadd.f32 %v1907, %v2126
        %v2128 = vpop.f32.mrb[0].mxu0
        %v2129 = vadd.f32 %v1903, %v2128
        %v2130 = vpop.f32.mrb[0].mxu0
        %v2131 = vadd.f32 %v1907, %v2130
        %2132 = vmatprep.mubr.bf16.mxu0 0
        %2133 = vmatmul.mubr.bf16.gmra.mrb[0].mxu0 %v1877
        %v2134 = vpop.f32.mrb[0].mxu0
        %v2135 = vadd.f32 %v1903, %v2134
        %v2136 = vpop.f32.mrb[0].mxu0
        %v2137 = vadd.f32 %v1907, %v2136
        %v2138 = vpop.f32.mrb[0].mxu0
        %v2139 = vadd.f32 %v1903, %v2138
        %v2140 = vpop.f32.mrb[0].mxu0
        %v2141 = vadd.f32 %v1907, %v2140
        %2142 = vmatprep.mubr.bf16.mxu0 0
        %2143 = vmatmul.mubr.bf16.gmra.mrb[0].mxu0 %v1878
        %v2144 = vpop.f32.mrb[0].mxu0
        %v2145 = vadd.f32 %v1903, %v2144
        %v2146 = vpop.f32.mrb[0].mxu0
        %v2147 = vadd.f32 %v1907, %v2146
        %v2148 = vpop.f32.mrb[0].mxu0
        %v2149 = vadd.f32 %v1903, %v2148
        %v2150 = vpop.f32.mrb[0].mxu0
        %v2151 = vadd.f32 %v1907, %v2150
        %2152 = vmatprep.mubr.bf16.mxu0 0
        %2153 = vmatmul.mubr.bf16.gmra.mrb[0].mxu0 %v1879
        %v2154 = vpop.f32.mrb[0].mxu0
        %v2155 = vadd.f32 %v1903, %v2154
        %v2156 = vpop.f32.mrb[0].mxu0
        %v2157 = vadd.f32 %v1907, %v2156
        %v2158 = vpop.f32.mrb[0].mxu0
        %v2159 = vadd.f32 %v1903, %v2158
        %v2160 = vpop.f32.mrb[0].mxu0
        %v2161 = vadd.f32 %v1907, %v2160
        %2162 = vmatprep.mubr.bf16.mxu0 0
        %2163 = vmatmul.mubr.bf16.gmra.mrb[0].mxu0 %v1880
        %v2164 = vpop.f32.mrb[0].mxu0
        %v2165 = vadd.f32 %v1903, %v2164
        %v2166 = vpop.f32.mrb[0].mxu0
        %v2167 = vadd.f32 %v1907, %v2166
        %v2168 = vpop.f32.mrb[0].mxu0
        %v2169 = vadd.f32 %v1903, %v2168
        %v2170 = vpop.f32.mrb[0].mxu0
        %v2171 = vadd.f32 %v1907, %v2170
        %2172 = vmatprep.mubr.bf16.mxu0 0
        %2173 = vmatmul.mubr.bf16.gmra.mrb[0].mxu0 %v1881
        %v2174 = vpop.f32.mrb[0].mxu0
        %v2175 = vadd.f32 %v1903, %v2174
        %v2176 = vpop.f32.mrb[0].mxu0
        %v2177 = vadd.f32 %v1907, %v2176
        %v2178 = vpop.f32.mrb[0].mxu0
        %v2179 = vadd.f32 %v1903, %v2178
        %v2180 = vpop.f32.mrb[0].mxu0
        %v2181 = vadd.f32 %v1907, %v2180
        %2182 = vdwg.mxu0
        %2183 = vst [vmem:[%s409] sm:$0xff] %v2025
        %2184 = vst [vmem:[%s409 + $0x8] sm:$0xff] %v2027
        %2185 = vst [vmem:[%s409 + $0x10] sm:$0xff] %v2029
        %2186 = vst [vmem:[%s409 + $0x18] sm:$0xff] %v2031
        %2187 = vst [vmem:[%s409 + $0x20] sm:$0xff] %v2035
        %2188 = vst [vmem:[%s409 + $0x28] sm:$0xff] %v2037
        %2189 = vst [vmem:[%s409 + $0x30] sm:$0xff] %v2039
        %2190 = vst [vmem:[%s409 + $0x38] sm:$0xff] %v2041
        %2191 = vst [vmem:[%s409 + $0x40] sm:$0xff] %v2045
        %2192 = vst [vmem:[%s409 + $0x48] sm:$0xff] %v2047
        %2193 = vst [vmem:[%s409 + $0x50] sm:$0xff] %v2049
        %2194 = vst [vmem:[%s409 + $0x58] sm:$0xff] %v2051
        %2195 = vst [vmem:[%s409 + $0x60] sm:$0xff] %v2055
        %2196 = vst [vmem:[%s409 + $0x68] sm:$0xff] %v2057
        %2197 = vst [vmem:[%s409 + $0x70] sm:$0xff] %v2059
        %2198 = vst [vmem:[%s409 + $0x78] sm:$0xff] %v2061
        %2199 = vst [vmem:[%s409 + $0x80] sm:$0xff] %v2065
        %2200 = vst [vmem:[%s409 + $0x88] sm:$0xff] %v2067
        %2201 = vst [vmem:[%s409 + $0x90] sm:$0xff] %v2069
        %2202 = vst [vmem:[%s409 + $0x98] sm:$0xff] %v2071
        %2203 = vst [vmem:[%s409 + $0xa0] sm:$0xff] %v2075
        %2204 = vst [vmem:[%s409 + $0xa8] sm:$0xff] %v2077
        %2205 = vst [vmem:[%s409 + $0xb0] sm:$0xff] %v2079
        %2206 = vst [vmem:[%s409 + $0xb8] sm:$0xff] %v2081
        %2207 = vst [vmem:[%s409 + $0xc0] sm:$0xff] %v2085
        %2208 = vst [vmem:[%s409 + $0xc8] sm:$0xff] %v2087
        %2209 = vst [vmem:[%s409 + $0xd0] sm:$0xff] %v2089
        %2210 = vst [vmem:[%s409 + $0xd8] sm:$0xff] %v2091
        %2211 = vst [vmem:[%s409 + $0xe0] sm:$0xff] %v2095
        %2212 = vst [vmem:[%s409 + $0xe8] sm:$0xff] %v2097
        %2213 = vst [vmem:[%s409 + $0xf0] sm:$0xff] %v2099
        %2214 = vst [vmem:[%s409 + $0xf8] sm:$0xff] %v2101
        %2215 = vst [vmem:[%s409 + $0x100] sm:$0xff] %v2105
        %2216 = vst [vmem:[%s409 + $0x108] sm:$0xff] %v2107
        %2217 = vst [vmem:[%s409 + $0x110] sm:$0xff] %v2109
        %2218 = vst [vmem:[%s409 + $0x118] sm:$0xff] %v2111
        %2219 = vst [vmem:[%s409 + $0x120] sm:$0xff] %v2115
        %2220 = vst [vmem:[%s409 + $0x128] sm:$0xff] %v2117
        %2221 = vst [vmem:[%s409 + $0x130] sm:$0xff] %v2119
        %2222 = vst [vmem:[%s409 + $0x138] sm:$0xff] %v2121
        %2223 = vst [vmem:[%s409 + $0x140] sm:$0xff] %v2125
        %2224 = vst [vmem:[%s409 + $0x148] sm:$0xff] %v2127
        %2225 = vst [vmem:[%s409 + $0x150] sm:$0xff] %v2129
        %2226 = vst [vmem:[%s409 + $0x158] sm:$0xff] %v2131
        %2227 = vst [vmem:[%s409 + $0x160] sm:$0xff] %v2135
        %2228 = vst [vmem:[%s409 + $0x168] sm:$0xff] %v2137
        %2229 = vst [vmem:[%s409 + $0x170] sm:$0xff] %v2139
        %2230 = vst [vmem:[%s409 + $0x178] sm:$0xff] %v2141
        %2231 = vst [vmem:[%s409 + $0x180] sm:$0xff] %v2145
        %2232 = vst [vmem:[%s409 + $0x188] sm:$0xff] %v2147
        %2233 = vst [vmem:[%s409 + $0x190] sm:$0xff] %v2149
        %2234 = vst [vmem:[%s409 + $0x198] sm:$0xff] %v2151
        %2235 = vst [vmem:[%s409 + $0x1a0] sm:$0xff] %v2155
        %2236 = vst [vmem:[%s409 + $0x1a8] sm:$0xff] %v2157
        %2237 = vst [vmem:[%s409 + $0x1b0] sm:$0xff] %v2159
        %2238 = vst [vmem:[%s409 + $0x1b8] sm:$0xff] %v2161
        %2239 = vst [vmem:[%s409 + $0x1c0] sm:$0xff] %v2165
        %2240 = vst [vmem:[%s409 + $0x1c8] sm:$0xff] %v2167
        %2241 = vst [vmem:[%s409 + $0x1d0] sm:$0xff] %v2169
        %2242 = vst [vmem:[%s409 + $0x1d8] sm:$0xff] %v2171
        %2243 = vst [vmem:[%s409 + $0x1e0] sm:$0xff] %v2175
        %2244 = vst [vmem:[%s409 + $0x1e8] sm:$0xff] %v2177
        %2245 = vst [vmem:[%s409 + $0x1f0] sm:$0xff] %v2179
        %2246 = vst [vmem:[%s409 + $0x1f8] sm:$0xff] %v2181
        %s2247 = sand.u32 %s230, 1
        %s2248 = scalar_lea.sflag [#allocation4], %s2247
        %s2249 = sand.u32 %s230, 1
        %s2250 = smul.addr %s2249, 512
        %s2251 = scalar_lea.vmem [#allocation11], %s2250
        // Predicated region
        $region77: #{tpu_custom_call.1} parent=55 // pred_check
          %p2252 = pneg %p240
        $region78: #{tpu_custom_call.1} parent=55 // pred_check_branch
          %2254 = sbr.rel (%p2252) target = $region80
        $region79: #{tpu_custom_call.1} parent=55 // pred_region
          %s2255 = smul.u32 32, %s28
          %s2257 = ssub.s32 8192, 8192
          %2258 = vsyncadd %s2248, %s2257
          %s2259 = smul.addr %s2255, 2
          %s2260 = smul.addr %s2259, 128
          %s2261 = scalar_lea.hbm %s9, %s2260
          %s2262 = sshll.u32 %s2251, 4
          %s2263 = int_to_ptr.vmem [resolvable:$true] %s2262
          %2268 = dma.vmem_to_hbm [thread:$0]  %s2263, 8192, %s2261, %s2248, 256, 256, 16
        $region80: #{tpu_custom_call.1} parent=55 // pred_fallthru
          _
      $region56: #{tpu_custom_call.1} parent=5 // pred_fallthru
        _
      %p2269 = scmp.le.s32.totalorder 2, %s23
      // Predicated region
      $region81: #{tpu_custom_call.1} parent=5 // pred_check
        %p2270 = pneg %p2269
      $region82: #{tpu_custom_call.1} parent=5 // pred_check_branch
        %2272 = sbr.rel (%p2270) target = $region84
      $region83: #{tpu_custom_call.1} parent=5 // pred_region
        %s2273 = ssub.s32 %s23, 2
        // Predicated region
        $region85: #{tpu_custom_call.1} parent=83 // pred_check
          %p2274 = pneg %p246
        $region86: #{tpu_custom_call.1} parent=83 // pred_check_branch
          %2276 = sbr.rel (%p2274) target = $region88
        $region87: #{tpu_custom_call.1} parent=83 // pred_region
          %s2277 = sand.u32 %s231, 1
          %s2278 = scalar_lea.sflag [#allocation4], %s2277
          %s2279 = sand.u32 %s231, 1
          %s2280 = smul.addr %s2279, 512
          %s2281 = scalar_lea.vmem [#allocation11], %s2280
          %2282 = dma.done %s2278, 8192
        $region88: #{tpu_custom_call.1} parent=83 // pred_fallthru
          _
      $region84: #{tpu_custom_call.1} parent=5 // pred_fallthru
        _
    $region6: #{tpu_custom_call.1} parent=1 // loop_footer
      %s27 = sadd.s32 1, %s23
    $region7: #{tpu_custom_call.1} parent=1 // loop_footer_branch
      %22 = sbr.rel target = $region3
    $region8: #{tpu_custom_call.1} parent=1 // loop_exit
      _
    %2283 = vsyncpa [#allocation3], 1
    %s2284 = scalar_lea.sflag [#allocation3], 1
    %2285 = vsyncpa %s2284, 1
    %2286 = vsyncpa [#allocation6], 1
    %2287 = vsyncpa [#allocation9], 1
    %2288 = vsyncpa [#allocation4], 1
    %s2289 = scalar_lea.sflag [#allocation4], 1
    %2290 = vsyncpa %s2289, 1

</llo_original>
